<compile_context>
chip_gen: v5e
topology: v5e:2x2
jax: 0.10.0
libtpu: 0.0.40
codegen_flags: <defaults>
</compile_context>

<pallas_src>
import functools

import jax
import jax.numpy as jnp
from jax.experimental import pallas as pl
from jax.experimental.pallas import tpu as pltpu

_LANE = 128
_NEG_INF = -1e30


def _round_up(x, m):
    return (x + m - 1) // m * m


def _sigmoid(x):
    # Used by the pure-JAX reference; the kernel folds this into one wide tanh.
    return 0.5 * jnp.tanh(0.5 * x) + 0.5


def _vmem_budget_bytes():
    """~75% of physical VMEM; conservative 48 MiB fallback (v7x has 64 MiB/TC)."""
    cap = None
    try:
        info = pltpu.get_tpu_info()
        cap = getattr(info, "vmem_capacity_bytes", None)
    except Exception:
        cap = None
    if not cap:
        cap = 64 * 1024 * 1024
    return int(cap) * 3 // 4


def _pick_block_len(S, max_ts):
    """Largest divisor of S that fits the VMEM-derived timestep cap."""
    max_ts = max(1, min(int(S), int(max_ts)))
    if S <= max_ts:
        return S
    for cand in range(max_ts, 0, -1):
        if S % cand == 0:
            return cand
    return 1


def _pad_gate_cols(w, H, Hp, prescale=True):
    """w: (K, 4*H), gate blocks [i|f|g|o] along columns.

    Pads each gate block to Hp lanes and (if prescale) scales the i/f/o blocks
    by 0.5 so sigmoid can be computed from a single tanh in-kernel. Power-of-two
    scaling is exact, so semantics are unchanged.
    """
    K = w.shape[0]
    w4 = w.reshape(K, 4, H)
    if prescale:
        scale = jnp.array([0.5, 0.5, 1.0, 0.5], jnp.float32).reshape(1, 4, 1)
        w4 = w4 * scale
    w4 = jnp.pad(w4, ((0, 0), (0, 0), (0, Hp - H)))
    return w4.reshape(K, 4 * Hp)


def _lstm_classifier_kernel(x_ref, wih_ref, whh_ref, b_ref, wout_ref, bout_ref,
                            o_ref, h_sc, c_sc, xp_sc,
                            *, hidden_pad, ts, mm_dtype, unroll):
    s = pl.program_id(0)
    Hp = hidden_pad
    B = x_ref.shape[1]
    E = x_ref.shape[2]

    @pl.when(s == 0)
    def _init():
        h_sc[...] = jnp.zeros_like(h_sc)
        c_sc[...] = jnp.zeros_like(c_sc)

    # Hoisted input projection for the whole sequence block: one tall
    # (ts*B, E) @ (E, 4Hp) MXU matmul, off the serial critical path.
    # Stored time-major in VMEM scratch so each step reads a leading-dim slice.
    x_flat = x_ref[...].reshape(ts * B, E)                      # already mm_dtype
    xp = jnp.dot(x_flat, wih_ref[...], preferred_element_type=jnp.float32)
    xp = xp + b_ref[...]                                        # (ts*B, 4Hp)
    xp_sc[...] = xp.reshape(ts, B, 4 * Hp)

    def step(t, carry):
        h, c = carry
        g = xp_sc[t] + jnp.dot(h.astype(mm_dtype), whh_ref[...],
                               preferred_element_type=jnp.float32)
        # Gate columns of W/b were pre-scaled by 0.5 for i/f/o, so all four
        # nonlinearities collapse into ONE wide tanh (single EUP stream):
        #   sigmoid(x) = 0.5 * tanh(0.5 * x) + 0.5
        tg = jnp.tanh(g)                                        # (B, 4Hp)
        i_g = 0.5 * tg[:, 0 * Hp:1 * Hp] + 0.5
        f_g = 0.5 * tg[:, 1 * Hp:2 * Hp] + 0.5
        g_g = tg[:, 2 * Hp:3 * Hp]
        o_g = 0.5 * tg[:, 3 * Hp:4 * Hp] + 0.5
        c = f_g * c + i_g * g_g
        h = o_g * jnp.tanh(c)
        return (h, c)

    h, c = jax.lax.fori_loop(0, ts, step, (h_sc[...], c_sc[...]), unroll=unroll)
    h_sc[...] = h
    c_sc[...] = c

    @pl.when(s == pl.num_programs(0) - 1)
    def _final():
        # hidden2tag: h_T @ W_out^T + b_out -> (B, Tp); padded logits carry a
        # -1e30 bias so they vanish in the log-softmax.
        tag = jnp.dot(h.astype(mm_dtype), wout_ref[...],
                      preferred_element_type=jnp.float32) + bout_ref[...]
        m = jnp.max(tag, axis=1, keepdims=True)
        shifted = tag - m
        lse = jnp.log(jnp.sum(jnp.exp(shifted), axis=1, keepdims=True))
        o_ref[...] = (shifted - lse).astype(o_ref.dtype)


def lstm_classifier_forward(inputs, params, *, use_bf16=True):
    """inputs: (B, S, E) float32, batch_first like nn.LSTM(batch_first=True)."""
    B, S, E = inputs.shape
    w_ih = params["w_ih"]          # (4H, E)  torch weight_ih_l0
    w_hh = params["w_hh"]          # (4H, H)  torch weight_hh_l0
    w_out = params["w_out"]        # (T, H)   torch hidden2tag.weight
    H = w_hh.shape[1]
    T = w_out.shape[0]

    Hp = _round_up(H, _LANE)
    Tp = _round_up(T, _LANE)
    mm_dtype = jnp.bfloat16 if use_bf16 else jnp.float32

    # Gate-padded, lane-aligned, pre-scaled weights (zero pads keep the
    # recurrence exact: padded h/c lanes stay identically zero).
    wih_p = _pad_gate_cols(jnp.transpose(w_ih), H, Hp).astype(mm_dtype)         # (E, 4Hp)
    whh_p = _pad_gate_cols(jnp.transpose(w_hh), H, Hp)                          # (H, 4Hp)
    whh_p = jnp.pad(whh_p, ((0, Hp - H), (0, 0))).astype(mm_dtype)              # (Hp, 4Hp)
    bias_p = _pad_gate_cols((params["b_ih"] + params["b_hh"]).reshape(1, 4 * H),
                            H, Hp).astype(jnp.float32)                          # (1, 4Hp)
    wout_p = jnp.pad(jnp.transpose(w_out),
                     ((0, Hp - H), (0, Tp - T))).astype(mm_dtype)               # (Hp, Tp)
    bout_p = jnp.pad(params["b_out"].reshape(1, T), ((0, 0), (0, Tp - T)),
                     constant_values=_NEG_INF).astype(jnp.float32)              # (1, Tp)

    # Cast to the matmul dtype and go time-major ONCE in the wrapper: halves the
    # streamed DMA (bf16) and makes both the x block and xp scratch leading-dim
    # indexed.
    x_tm = jnp.transpose(inputs, (1, 0, 2)).astype(mm_dtype)                    # (S, B, E)

    # --- VMEM budget -> sequence-block length ts --------------------------
    nbytes = lambda a: int(a.size) * a.dtype.itemsize
    x_itemsize = jnp.dtype(mm_dtype).itemsize
    weight_bytes = sum(nbytes(a) for a in (wih_p, whh_p, bias_p, wout_p, bout_p))
    out_bytes = B * Tp * 4
    state_bytes = 2 * B * Hp * 4
    fixed_bytes = 2 * (weight_bytes + out_bytes) + state_bytes                  # dbl-buffered
    per_ts_bytes = 2 * B * E * x_itemsize + B * 4 * Hp * 4                      # x(dbl) + xp scratch
    budget = _vmem_budget_bytes()
    # Use at most ~half the budget for the ts-dependent buffers; aim for the
    # largest block (amortizes the serial ~0.35us/step grid overhead and fills
    # the MXU M dimension with B*ts rows).
    max_ts = int(max(8, (budget // 2 - fixed_bytes) // max(per_ts_bytes, 1)))
    ts = _pick_block_len(S, max_ts)
    assert S % ts == 0

    x_blk_bytes = ts * B * E * x_itemsize
    xp_bytes = ts * B * 4 * Hp * 4
    needed = fixed_bytes + 2 * x_blk_bytes + xp_bytes
    vmem_limit = int(min(budget, max(32 * 1024 * 1024, 2 * needed)))

    unroll = True if ts <= 8 else 8
    kernel = functools.partial(_lstm_classifier_kernel, hidden_pad=Hp, ts=ts,
                               mm_dtype=mm_dtype, unroll=unroll)

    out_p = pl.pallas_call(
        kernel,
        out_shape=jax.ShapeDtypeStruct((B, Tp), jnp.float32),
        grid_spec=pltpu.PrefetchScalarGridSpec(
            num_scalar_prefetch=0,
            grid=(S // ts,),                                       # sequence blocks (serial)
            in_specs=[
                pl.BlockSpec((ts, B, E), lambda s: (s, 0, 0)),     # x block (time-major)
                pl.BlockSpec((E, 4 * Hp), lambda s: (0, 0)),       # W_ih^T (gate-padded, prescaled)
                pl.BlockSpec((Hp, 4 * Hp), lambda s: (0, 0)),      # W_hh^T
                pl.BlockSpec((1, 4 * Hp), lambda s: (0, 0)),       # b_ih + b_hh
                pl.BlockSpec((Hp, Tp), lambda s: (0, 0)),          # W_out^T
                pl.BlockSpec((1, Tp), lambda s: (0, 0)),           # b_out
            ],
            out_specs=pl.BlockSpec((B, Tp), lambda s: (0, 0)),     # resident output
            scratch_shapes=[
                pltpu.VMEM((B, Hp), jnp.float32),                  # h state
                pltpu.VMEM((B, Hp), jnp.float32),                  # c state
                pltpu.VMEM((ts, B, 4 * Hp), jnp.float32),          # per-block input proj
            ],
        ),
        compiler_params=pltpu.CompilerParams(
            dimension_semantics=("arbitrary",),                    # serial recurrence
            vmem_limit_bytes=vmem_limit,
        ),
    )(x_tm, wih_p, whh_p, bias_p, wout_p, bout_p)

    return out_p[:, :T]


def init_params(key, embedding_dim, hidden_dim, tagset_size):
    """Deterministic init, matching the PyTorch parameter shapes."""
    k = jax.random.split(key, 6)
    scale = 1.0 / jnp.sqrt(hidden_dim)
    u = lambda kk, shape: jax.random.uniform(kk, shape, jnp.float32, -scale, scale)
    return {
        "w_ih": u(k[0], (4 * hidden_dim, embedding_dim)),   # torch weight_ih_l0
        "w_hh": u(k[1], (4 * hidden_dim, hidden_dim)),      # torch weight_hh_l0
        "b_ih": u(k[2], (4 * hidden_dim,)),
        "b_hh": u(k[3], (4 * hidden_dim,)),
        "w_out": u(k[4], (tagset_size, hidden_dim)),        # torch hidden2tag.weight
        "b_out": u(k[5], (tagset_size,)),
    }


def reference_forward(inputs, params, *, use_bf16=True):
    """Pure-JAX reference using the same matmul dtypes as the kernel."""
    B, S, E = inputs.shape
    H = params["w_hh"].shape[1]
    dt = jnp.bfloat16 if use_bf16 else jnp.float32
    wih_t = jnp.transpose(params["w_ih"]).astype(dt)
    whh_t = jnp.transpose(params["w_hh"]).astype(dt)
    wout_t = jnp.transpose(params["w_out"]).astype(dt)
    bias = (params["b_ih"] + params["b_hh"]).astype(jnp.float32)
    h = jnp.zeros((B, H), jnp.float32)
    c = jnp.zeros((B, H), jnp.float32)
    for t in range(S):
        x_t = inputs[:, t, :].astype(dt)
        g = (jnp.dot(x_t, wih_t, preferred_element_type=jnp.float32)
             + jnp.dot(h.astype(dt), whh_t, preferred_element_type=jnp.float32)
             + bias)
        i_g = _sigmoid(g[:, 0 * H:1 * H])
        f_g = _sigmoid(g[:, 1 * H:2 * H])
        g_g = jnp.tanh(g[:, 2 * H:3 * H])
        o_g = _sigmoid(g[:, 3 * H:4 * H])
        c = f_g * c + i_g * g_g
        h = o_g * jnp.tanh(c)
    tag = jnp.dot(h.astype(dt), wout_t,
                  preferred_element_type=jnp.float32) + params["b_out"]
    return jax.nn.log_softmax(tag, axis=1)


if __name__ == "__main__":
    # Small shapes consistent with the module: (batch, seq, embedding_dim).
    B, S, E, H, T = 2, 8, 16, 32, 4

    key = jax.random.PRNGKey(0)
    k_x, k_p = jax.random.split(key)
    x = jax.random.normal(k_x, (B, S, E), jnp.float32)
    params = init_params(k_p, E, H, T)

    out = lstm_classifier_forward(x, params)
    out = jax.block_until_ready(out)

    ref = reference_forward(x, params)
    assert out.shape == (B, T)
    assert jnp.allclose(out, ref, atol=2e-2, rtol=2e-2), "Pallas output mismatch"

    print("KERNEL_OK")
</pallas_src>

<mosaic_0001>
module attributes {stable_mosaic.version = 11 : i64} {
  func.func @_lstm_classifier_kernel(%arg0: i32, %arg1: memref<8x2x16xbf16, #tpu.memory_space<vmem>>, %arg2: memref<16x512xbf16, #tpu.memory_space<vmem>>, %arg3: memref<128x512xbf16, #tpu.memory_space<vmem>>, %arg4: memref<1x512xf32, #tpu.memory_space<vmem>>, %arg5: memref<128x128xbf16, #tpu.memory_space<vmem>>, %arg6: memref<1x128xf32, #tpu.memory_space<vmem>>, %arg7: memref<2x128xf32, #tpu.memory_space<vmem>>, %arg8: memref<2x128xf32, #tpu.memory_space<vmem>>, %arg9: memref<2x128xf32, #tpu.memory_space<vmem>>, %arg10: memref<8x2x512xf32, #tpu.memory_space<vmem>>) attributes {dimension_semantics = [#tpu.dimension_semantics<arbitrary>], iteration_bounds = array<i64: 1>, scalar_prefetch = 0 : i64, scratch_operands = 3 : i64, tpu.core_type = #tpu.core_type<tc>, window_params = [{transform_indices = @transform_0, window_bounds = array<i64: 8, 2, 16>}, {pipeline_mode = #tpu.pipeline_mode<synchronous>, transform_indices = @transform_1, window_bounds = array<i64: 16, 512>}, {pipeline_mode = #tpu.pipeline_mode<synchronous>, transform_indices = @transform_2, window_bounds = array<i64: 128, 512>}, {pipeline_mode = #tpu.pipeline_mode<synchronous>, transform_indices = @transform_3, window_bounds = array<i64: 1, 512>}, {pipeline_mode = #tpu.pipeline_mode<synchronous>, transform_indices = @transform_4, window_bounds = array<i64: 128, 128>}, {pipeline_mode = #tpu.pipeline_mode<synchronous>, transform_indices = @transform_5, window_bounds = array<i64: 1, 128>}, {pipeline_mode = #tpu.pipeline_mode<synchronous>, transform_indices = @transform_6, window_bounds = array<i64: 2, 128>}]} {
    %c0_i32 = arith.constant 0 : i32
    %0 = arith.cmpi eq, %arg0, %c0_i32 : i32
    %1 = arith.extui %0 : i1 to i32
    %c0_i32_0 = arith.constant 0 : i32
    %2 = arith.cmpi ne, %1, %c0_i32_0 : i32
    scf.if %2 {
      %cst_109 = arith.constant 0.000000e+00 : f32
      %251 = vector.broadcast %cst_109 : f32 to vector<2x128xf32>
      %c0_110 = arith.constant 0 : index
      %c0_111 = arith.constant 0 : index
      %252 = vector.load %arg8[%c0_110, %c0_111] : memref<2x128xf32, #tpu.memory_space<vmem>>, vector<2x128xf32>
      tpu.vector_store %arg8[%c0_110, %c0_111], %251 {strides = array<i32>} : memref<2x128xf32, #tpu.memory_space<vmem>>, vector<2x128xf32>,
      %cst_112 = arith.constant 0.000000e+00 : f32
      %253 = vector.broadcast %cst_112 : f32 to vector<2x128xf32>
      %c0_113 = arith.constant 0 : index
      %c0_114 = arith.constant 0 : index
      %254 = vector.load %arg9[%c0_113, %c0_114] : memref<2x128xf32, #tpu.memory_space<vmem>>, vector<2x128xf32>
      tpu.vector_store %arg9[%c0_113, %c0_114], %253 {strides = array<i32>} : memref<2x128xf32, #tpu.memory_space<vmem>>, vector<2x128xf32>,
    } else {
    }
    %c0 = arith.constant 0 : index
    %c0_1 = arith.constant 0 : index
    %c0_2 = arith.constant 0 : index
    %3 = vector.load %arg1[%c0, %c0_1, %c0_2] : memref<8x2x16xbf16, #tpu.memory_space<vmem>>, vector<8x2x16xbf16>
    %4 = vector.shape_cast %3 : vector<8x2x16xbf16> to vector<16x16xbf16>
    %c0_3 = arith.constant 0 : index
    %c0_4 = arith.constant 0 : index
    %5 = vector.load %arg2[%c0_3, %c0_4] : memref<16x512xbf16, #tpu.memory_space<vmem>>, vector<16x512xbf16>
    %cst = arith.constant dense<0.000000e+00> : vector<16x512xf32>
    %6 = tpu.matmul %4, %5, %cst {dimension_numbers = #tpu.dot_dimension_numbers<[1], [0], [0], [1], [0, 0, 1, 1], [], []>} : vector<16x16xbf16>, vector<16x512xbf16>, vector<16x512xf32> -> vector<16x512xf32>
    %c0_5 = arith.constant 0 : index
    %c0_6 = arith.constant 0 : index
    %7 = vector.load %arg4[%c0_5, %c0_6] : memref<1x512xf32, #tpu.memory_space<vmem>>, vector<1x512xf32>
    %8 = vector.broadcast %7 : vector<1x512xf32> to vector<16x512xf32>
    %9 = arith.addf %6, %8 : vector<16x512xf32>
    %10 = vector.shape_cast %9 : vector<16x512xf32> to vector<8x2x512xf32>
    %c0_7 = arith.constant 0 : index
    %c0_8 = arith.constant 0 : index
    %c0_9 = arith.constant 0 : index
    %11 = vector.load %arg10[%c0_7, %c0_8, %c0_9] : memref<8x2x512xf32, #tpu.memory_space<vmem>>, vector<8x2x512xf32>
    tpu.vector_store %arg10[%c0_7, %c0_8, %c0_9], %10 {strides = array<i32>} : memref<8x2x512xf32, #tpu.memory_space<vmem>>, vector<8x2x512xf32>,
    %c0_10 = arith.constant 0 : index
    %c0_11 = arith.constant 0 : index
    %12 = vector.load %arg8[%c0_10, %c0_11] : memref<2x128xf32, #tpu.memory_space<vmem>>, vector<2x128xf32>
    %c0_12 = arith.constant 0 : index
    %c0_13 = arith.constant 0 : index
    %13 = vector.load %arg9[%c0_12, %c0_13] : memref<2x128xf32, #tpu.memory_space<vmem>>, vector<2x128xf32>
    %c0_i32_14 = arith.constant 0 : i32
    %14 = arith.index_cast %c0_i32_14 : i32 to index
    %c0_15 = arith.constant 0 : index
    %c0_16 = arith.constant 0 : index
    %15 = vector.load %arg10[%14, %c0_15, %c0_16] : memref<8x2x512xf32, #tpu.memory_space<vmem>>, vector<1x2x512xf32>
    %16 = vector.shape_cast %15 : vector<1x2x512xf32> to vector<2x512xf32>
    %17 = arith.truncf %12 : vector<2x128xf32> to vector<2x128xbf16>
    %c0_17 = arith.constant 0 : index
    %c0_18 = arith.constant 0 : index
    %18 = vector.load %arg3[%c0_17, %c0_18] : memref<128x512xbf16, #tpu.memory_space<vmem>>, vector<128x512xbf16>
    %cst_19 = arith.constant dense<0.000000e+00> : vector<2x512xf32>
    %19 = tpu.matmul %17, %18, %cst_19 {dimension_numbers = #tpu.dot_dimension_numbers<[1], [0], [0], [1], [0, 0, 1, 1], [], []>} : vector<2x128xbf16>, vector<128x512xbf16>, vector<2x512xf32> -> vector<2x512xf32>
    %20 = arith.addf %16, %19 : vector<2x512xf32>
    %21 = math.tanh %20 : vector<2x512xf32>
    %22 = vector.extract_strided_slice %21 {offsets = [0, 0], sizes = [2, 128], strides = [1, 1]} : vector<2x512xf32> to vector<2x128xf32>
    %cst_20 = arith.constant 5.000000e-01 : f32
    %23 = vector.broadcast %cst_20 : f32 to vector<2x128xf32>
    %24 = arith.mulf %23, %22 : vector<2x128xf32>
    %cst_21 = arith.constant 5.000000e-01 : f32
    %25 = vector.broadcast %cst_21 : f32 to vector<2x128xf32>
    %26 = arith.addf %24, %25 : vector<2x128xf32>
    %27 = vector.extract_strided_slice %21 {offsets = [0, 128], sizes = [2, 128], strides = [1, 1]} : vector<2x512xf32> to vector<2x128xf32>
    %cst_22 = arith.constant 5.000000e-01 : f32
    %28 = vector.broadcast %cst_22 : f32 to vector<2x128xf32>
    %29 = arith.mulf %28, %27 : vector<2x128xf32>
    %cst_23 = arith.constant 5.000000e-01 : f32
    %30 = vector.broadcast %cst_23 : f32 to vector<2x128xf32>
    %31 = arith.addf %29, %30 : vector<2x128xf32>
    %32 = vector.extract_strided_slice %21 {offsets = [0, 256], sizes = [2, 128], strides = [1, 1]} : vector<2x512xf32> to vector<2x128xf32>
    %33 = vector.extract_strided_slice %21 {offsets = [0, 384], sizes = [2, 128], strides = [1, 1]} : vector<2x512xf32> to vector<2x128xf32>
    %cst_24 = arith.constant 5.000000e-01 : f32
    %34 = vector.broadcast %cst_24 : f32 to vector<2x128xf32>
    %35 = arith.mulf %34, %33 : vector<2x128xf32>
    %cst_25 = arith.constant 5.000000e-01 : f32
    %36 = vector.broadcast %cst_25 : f32 to vector<2x128xf32>
    %37 = arith.addf %35, %36 : vector<2x128xf32>
    %38 = arith.mulf %31, %13 : vector<2x128xf32>
    %39 = arith.mulf %26, %32 : vector<2x128xf32>
    %40 = arith.addf %38, %39 : vector<2x128xf32>
    %41 = math.tanh %40 : vector<2x128xf32>
    %42 = arith.mulf %37, %41 : vector<2x128xf32>
    %c1_i32 = arith.constant 1 : i32
    %43 = arith.index_cast %c1_i32 : i32 to index
    %c0_26 = arith.constant 0 : index
    %c0_27 = arith.constant 0 : index
    %44 = vector.load %arg10[%43, %c0_26, %c0_27] : memref<8x2x512xf32, #tpu.memory_space<vmem>>, vector<1x2x512xf32>
    %45 = vector.shape_cast %44 : vector<1x2x512xf32> to vector<2x512xf32>
    %46 = arith.truncf %42 : vector<2x128xf32> to vector<2x128xbf16>
    %c0_28 = arith.constant 0 : index
    %c0_29 = arith.constant 0 : index
    %47 = vector.load %arg3[%c0_28, %c0_29] : memref<128x512xbf16, #tpu.memory_space<vmem>>, vector<128x512xbf16>
    %cst_30 = arith.constant dense<0.000000e+00> : vector<2x512xf32>
    %48 = tpu.matmul %46, %47, %cst_30 {dimension_numbers = #tpu.dot_dimension_numbers<[1], [0], [0], [1], [0, 0, 1, 1], [], []>} : vector<2x128xbf16>, vector<128x512xbf16>, vector<2x512xf32> -> vector<2x512xf32>
    %49 = arith.addf %45, %48 : vector<2x512xf32>
    %50 = math.tanh %49 : vector<2x512xf32>
    %51 = vector.extract_strided_slice %50 {offsets = [0, 0], sizes = [2, 128], strides = [1, 1]} : vector<2x512xf32> to vector<2x128xf32>
    %cst_31 = arith.constant 5.000000e-01 : f32
    %52 = vector.broadcast %cst_31 : f32 to vector<2x128xf32>
    %53 = arith.mulf %52, %51 : vector<2x128xf32>
    %cst_32 = arith.constant 5.000000e-01 : f32
    %54 = vector.broadcast %cst_32 : f32 to vector<2x128xf32>
    %55 = arith.addf %53, %54 : vector<2x128xf32>
    %56 = vector.extract_strided_slice %50 {offsets = [0, 128], sizes = [2, 128], strides = [1, 1]} : vector<2x512xf32> to vector<2x128xf32>
    %cst_33 = arith.constant 5.000000e-01 : f32
    %57 = vector.broadcast %cst_33 : f32 to vector<2x128xf32>
    %58 = arith.mulf %57, %56 : vector<2x128xf32>
    %cst_34 = arith.constant 5.000000e-01 : f32
    %59 = vector.broadcast %cst_34 : f32 to vector<2x128xf32>
    %60 = arith.addf %58, %59 : vector<2x128xf32>
    %61 = vector.extract_strided_slice %50 {offsets = [0, 256], sizes = [2, 128], strides = [1, 1]} : vector<2x512xf32> to vector<2x128xf32>
    %62 = vector.extract_strided_slice %50 {offsets = [0, 384], sizes = [2, 128], strides = [1, 1]} : vector<2x512xf32> to vector<2x128xf32>
    %cst_35 = arith.constant 5.000000e-01 : f32
    %63 = vector.broadcast %cst_35 : f32 to vector<2x128xf32>
    %64 = arith.mulf %63, %62 : vector<2x128xf32>
    %cst_36 = arith.constant 5.000000e-01 : f32
    %65 = vector.broadcast %cst_36 : f32 to vector<2x128xf32>
    %66 = arith.addf %64, %65 : vector<2x128xf32>
    %67 = arith.mulf %60, %40 : vector<2x128xf32>
    %68 = arith.mulf %55, %61 : vector<2x128xf32>
    %69 = arith.addf %67, %68 : vector<2x128xf32>
    %70 = math.tanh %69 : vector<2x128xf32>
    %71 = arith.mulf %66, %70 : vector<2x128xf32>
    %c2_i32 = arith.constant 2 : i32
    %72 = arith.index_cast %c2_i32 : i32 to index
    %c0_37 = arith.constant 0 : index
    %c0_38 = arith.constant 0 : index
    %73 = vector.load %arg10[%72, %c0_37, %c0_38] : memref<8x2x512xf32, #tpu.memory_space<vmem>>, vector<1x2x512xf32>
    %74 = vector.shape_cast %73 : vector<1x2x512xf32> to vector<2x512xf32>
    %75 = arith.truncf %71 : vector<2x128xf32> to vector<2x128xbf16>
    %c0_39 = arith.constant 0 : index
    %c0_40 = arith.constant 0 : index
    %76 = vector.load %arg3[%c0_39, %c0_40] : memref<128x512xbf16, #tpu.memory_space<vmem>>, vector<128x512xbf16>
    %cst_41 = arith.constant dense<0.000000e+00> : vector<2x512xf32>
    %77 = tpu.matmul %75, %76, %cst_41 {dimension_numbers = #tpu.dot_dimension_numbers<[1], [0], [0], [1], [0, 0, 1, 1], [], []>} : vector<2x128xbf16>, vector<128x512xbf16>, vector<2x512xf32> -> vector<2x512xf32>
    %78 = arith.addf %74, %77 : vector<2x512xf32>
    %79 = math.tanh %78 : vector<2x512xf32>
    %80 = vector.extract_strided_slice %79 {offsets = [0, 0], sizes = [2, 128], strides = [1, 1]} : vector<2x512xf32> to vector<2x128xf32>
    %cst_42 = arith.constant 5.000000e-01 : f32
    %81 = vector.broadcast %cst_42 : f32 to vector<2x128xf32>
    %82 = arith.mulf %81, %80 : vector<2x128xf32>
    %cst_43 = arith.constant 5.000000e-01 : f32
    %83 = vector.broadcast %cst_43 : f32 to vector<2x128xf32>
    %84 = arith.addf %82, %83 : vector<2x128xf32>
    %85 = vector.extract_strided_slice %79 {offsets = [0, 128], sizes = [2, 128], strides = [1, 1]} : vector<2x512xf32> to vector<2x128xf32>
    %cst_44 = arith.constant 5.000000e-01 : f32
    %86 = vector.broadcast %cst_44 : f32 to vector<2x128xf32>
    %87 = arith.mulf %86, %85 : vector<2x128xf32>
    %cst_45 = arith.constant 5.000000e-01 : f32
    %88 = vector.broadcast %cst_45 : f32 to vector<2x128xf32>
    %89 = arith.addf %87, %88 : vector<2x128xf32>
    %90 = vector.extract_strided_slice %79 {offsets = [0, 256], sizes = [2, 128], strides = [1, 1]} : vector<2x512xf32> to vector<2x128xf32>
    %91 = vector.extract_strided_slice %79 {offsets = [0, 384], sizes = [2, 128], strides = [1, 1]} : vector<2x512xf32> to vector<2x128xf32>
    %cst_46 = arith.constant 5.000000e-01 : f32
    %92 = vector.broadcast %cst_46 : f32 to vector<2x128xf32>
    %93 = arith.mulf %92, %91 : vector<2x128xf32>
    %cst_47 = arith.constant 5.000000e-01 : f32
    %94 = vector.broadcast %cst_47 : f32 to vector<2x128xf32>
    %95 = arith.addf %93, %94 : vector<2x128xf32>
    %96 = arith.mulf %89, %69 : vector<2x128xf32>
    %97 = arith.mulf %84, %90 : vector<2x128xf32>
    %98 = arith.addf %96, %97 : vector<2x128xf32>
    %99 = math.tanh %98 : vector<2x128xf32>
    %100 = arith.mulf %95, %99 : vector<2x128xf32>
    %c3_i32 = arith.constant 3 : i32
    %101 = arith.index_cast %c3_i32 : i32 to index
    %c0_48 = arith.constant 0 : index
    %c0_49 = arith.constant 0 : index
    %102 = vector.load %arg10[%101, %c0_48, %c0_49] : memref<8x2x512xf32, #tpu.memory_space<vmem>>, vector<1x2x512xf32>
    %103 = vector.shape_cast %102 : vector<1x2x512xf32> to vector<2x512xf32>
    %104 = arith.truncf %100 : vector<2x128xf32> to vector<2x128xbf16>
    %c0_50 = arith.constant 0 : index
    %c0_51 = arith.constant 0 : index
    %105 = vector.load %arg3[%c0_50, %c0_51] : memref<128x512xbf16, #tpu.memory_space<vmem>>, vector<128x512xbf16>
    %cst_52 = arith.constant dense<0.000000e+00> : vector<2x512xf32>
    %106 = tpu.matmul %104, %105, %cst_52 {dimension_numbers = #tpu.dot_dimension_numbers<[1], [0], [0], [1], [0, 0, 1, 1], [], []>} : vector<2x128xbf16>, vector<128x512xbf16>, vector<2x512xf32> -> vector<2x512xf32>
    %107 = arith.addf %103, %106 : vector<2x512xf32>
    %108 = math.tanh %107 : vector<2x512xf32>
    %109 = vector.extract_strided_slice %108 {offsets = [0, 0], sizes = [2, 128], strides = [1, 1]} : vector<2x512xf32> to vector<2x128xf32>
    %cst_53 = arith.constant 5.000000e-01 : f32
    %110 = vector.broadcast %cst_53 : f32 to vector<2x128xf32>
    %111 = arith.mulf %110, %109 : vector<2x128xf32>
    %cst_54 = arith.constant 5.000000e-01 : f32
    %112 = vector.broadcast %cst_54 : f32 to vector<2x128xf32>
    %113 = arith.addf %111, %112 : vector<2x128xf32>
    %114 = vector.extract_strided_slice %108 {offsets = [0, 128], sizes = [2, 128], strides = [1, 1]} : vector<2x512xf32> to vector<2x128xf32>
    %cst_55 = arith.constant 5.000000e-01 : f32
    %115 = vector.broadcast %cst_55 : f32 to vector<2x128xf32>
    %116 = arith.mulf %115, %114 : vector<2x128xf32>
    %cst_56 = arith.constant 5.000000e-01 : f32
    %117 = vector.broadcast %cst_56 : f32 to vector<2x128xf32>
    %118 = arith.addf %116, %117 : vector<2x128xf32>
    %119 = vector.extract_strided_slice %108 {offsets = [0, 256], sizes = [2, 128], strides = [1, 1]} : vector<2x512xf32> to vector<2x128xf32>
    %120 = vector.extract_strided_slice %108 {offsets = [0, 384], sizes = [2, 128], strides = [1, 1]} : vector<2x512xf32> to vector<2x128xf32>
    %cst_57 = arith.constant 5.000000e-01 : f32
    %121 = vector.broadcast %cst_57 : f32 to vector<2x128xf32>
    %122 = arith.mulf %121, %120 : vector<2x128xf32>
    %cst_58 = arith.constant 5.000000e-01 : f32
    %123 = vector.broadcast %cst_58 : f32 to vector<2x128xf32>
    %124 = arith.addf %122, %123 : vector<2x128xf32>
    %125 = arith.mulf %118, %98 : vector<2x128xf32>
    %126 = arith.mulf %113, %119 : vector<2x128xf32>
    %127 = arith.addf %125, %126 : vector<2x128xf32>
    %128 = math.tanh %127 : vector<2x128xf32>
    %129 = arith.mulf %124, %128 : vector<2x128xf32>
    %c4_i32 = arith.constant 4 : i32
    %130 = arith.index_cast %c4_i32 : i32 to index
    %c0_59 = arith.constant 0 : index
    %c0_60 = arith.constant 0 : index
    %131 = vector.load %arg10[%130, %c0_59, %c0_60] : memref<8x2x512xf32, #tpu.memory_space<vmem>>, vector<1x2x512xf32>
    %132 = vector.shape_cast %131 : vector<1x2x512xf32> to vector<2x512xf32>
    %133 = arith.truncf %129 : vector<2x128xf32> to vector<2x128xbf16>
    %c0_61 = arith.constant 0 : index
    %c0_62 = arith.constant 0 : index
    %134 = vector.load %arg3[%c0_61, %c0_62] : memref<128x512xbf16, #tpu.memory_space<vmem>>, vector<128x512xbf16>
    %cst_63 = arith.constant dense<0.000000e+00> : vector<2x512xf32>
    %135 = tpu.matmul %133, %134, %cst_63 {dimension_numbers = #tpu.dot_dimension_numbers<[1], [0], [0], [1], [0, 0, 1, 1], [], []>} : vector<2x128xbf16>, vector<128x512xbf16>, vector<2x512xf32> -> vector<2x512xf32>
    %136 = arith.addf %132, %135 : vector<2x512xf32>
    %137 = math.tanh %136 : vector<2x512xf32>
    %138 = vector.extract_strided_slice %137 {offsets = [0, 0], sizes = [2, 128], strides = [1, 1]} : vector<2x512xf32> to vector<2x128xf32>
    %cst_64 = arith.constant 5.000000e-01 : f32
    %139 = vector.broadcast %cst_64 : f32 to vector<2x128xf32>
    %140 = arith.mulf %139, %138 : vector<2x128xf32>
    %cst_65 = arith.constant 5.000000e-01 : f32
    %141 = vector.broadcast %cst_65 : f32 to vector<2x128xf32>
    %142 = arith.addf %140, %141 : vector<2x128xf32>
    %143 = vector.extract_strided_slice %137 {offsets = [0, 128], sizes = [2, 128], strides = [1, 1]} : vector<2x512xf32> to vector<2x128xf32>
    %cst_66 = arith.constant 5.000000e-01 : f32
    %144 = vector.broadcast %cst_66 : f32 to vector<2x128xf32>
    %145 = arith.mulf %144, %143 : vector<2x128xf32>
    %cst_67 = arith.constant 5.000000e-01 : f32
    %146 = vector.broadcast %cst_67 : f32 to vector<2x128xf32>
    %147 = arith.addf %145, %146 : vector<2x128xf32>
    %148 = vector.extract_strided_slice %137 {offsets = [0, 256], sizes = [2, 128], strides = [1, 1]} : vector<2x512xf32> to vector<2x128xf32>
    %149 = vector.extract_strided_slice %137 {offsets = [0, 384], sizes = [2, 128], strides = [1, 1]} : vector<2x512xf32> to vector<2x128xf32>
    %cst_68 = arith.constant 5.000000e-01 : f32
    %150 = vector.broadcast %cst_68 : f32 to vector<2x128xf32>
    %151 = arith.mulf %150, %149 : vector<2x128xf32>
    %cst_69 = arith.constant 5.000000e-01 : f32
    %152 = vector.broadcast %cst_69 : f32 to vector<2x128xf32>
    %153 = arith.addf %151, %152 : vector<2x128xf32>
    %154 = arith.mulf %147, %127 : vector<2x128xf32>
    %155 = arith.mulf %142, %148 : vector<2x128xf32>
    %156 = arith.addf %154, %155 : vector<2x128xf32>
    %157 = math.tanh %156 : vector<2x128xf32>
    %158 = arith.mulf %153, %157 : vector<2x128xf32>
    %c5_i32 = arith.constant 5 : i32
    %159 = arith.index_cast %c5_i32 : i32 to index
    %c0_70 = arith.constant 0 : index
    %c0_71 = arith.constant 0 : index
    %160 = vector.load %arg10[%159, %c0_70, %c0_71] : memref<8x2x512xf32, #tpu.memory_space<vmem>>, vector<1x2x512xf32>
    %161 = vector.shape_cast %160 : vector<1x2x512xf32> to vector<2x512xf32>
    %162 = arith.truncf %158 : vector<2x128xf32> to vector<2x128xbf16>
    %c0_72 = arith.constant 0 : index
    %c0_73 = arith.constant 0 : index
    %163 = vector.load %arg3[%c0_72, %c0_73] : memref<128x512xbf16, #tpu.memory_space<vmem>>, vector<128x512xbf16>
    %cst_74 = arith.constant dense<0.000000e+00> : vector<2x512xf32>
    %164 = tpu.matmul %162, %163, %cst_74 {dimension_numbers = #tpu.dot_dimension_numbers<[1], [0], [0], [1], [0, 0, 1, 1], [], []>} : vector<2x128xbf16>, vector<128x512xbf16>, vector<2x512xf32> -> vector<2x512xf32>
    %165 = arith.addf %161, %164 : vector<2x512xf32>
    %166 = math.tanh %165 : vector<2x512xf32>
    %167 = vector.extract_strided_slice %166 {offsets = [0, 0], sizes = [2, 128], strides = [1, 1]} : vector<2x512xf32> to vector<2x128xf32>
    %cst_75 = arith.constant 5.000000e-01 : f32
    %168 = vector.broadcast %cst_75 : f32 to vector<2x128xf32>
    %169 = arith.mulf %168, %167 : vector<2x128xf32>
    %cst_76 = arith.constant 5.000000e-01 : f32
    %170 = vector.broadcast %cst_76 : f32 to vector<2x128xf32>
    %171 = arith.addf %169, %170 : vector<2x128xf32>
    %172 = vector.extract_strided_slice %166 {offsets = [0, 128], sizes = [2, 128], strides = [1, 1]} : vector<2x512xf32> to vector<2x128xf32>
    %cst_77 = arith.constant 5.000000e-01 : f32
    %173 = vector.broadcast %cst_77 : f32 to vector<2x128xf32>
    %174 = arith.mulf %173, %172 : vector<2x128xf32>
    %cst_78 = arith.constant 5.000000e-01 : f32
    %175 = vector.broadcast %cst_78 : f32 to vector<2x128xf32>
    %176 = arith.addf %174, %175 : vector<2x128xf32>
    %177 = vector.extract_strided_slice %166 {offsets = [0, 256], sizes = [2, 128], strides = [1, 1]} : vector<2x512xf32> to vector<2x128xf32>
    %178 = vector.extract_strided_slice %166 {offsets = [0, 384], sizes = [2, 128], strides = [1, 1]} : vector<2x512xf32> to vector<2x128xf32>
    %cst_79 = arith.constant 5.000000e-01 : f32
    %179 = vector.broadcast %cst_79 : f32 to vector<2x128xf32>
    %180 = arith.mulf %179, %178 : vector<2x128xf32>
    %cst_80 = arith.constant 5.000000e-01 : f32
    %181 = vector.broadcast %cst_80 : f32 to vector<2x128xf32>
    %182 = arith.addf %180, %181 : vector<2x128xf32>
    %183 = arith.mulf %176, %156 : vector<2x128xf32>
    %184 = arith.mulf %171, %177 : vector<2x128xf32>
    %185 = arith.addf %183, %184 : vector<2x128xf32>
    %186 = math.tanh %185 : vector<2x128xf32>
    %187 = arith.mulf %182, %186 : vector<2x128xf32>
    %c6_i32 = arith.constant 6 : i32
    %188 = arith.index_cast %c6_i32 : i32 to index
    %c0_81 = arith.constant 0 : index
    %c0_82 = arith.constant 0 : index
    %189 = vector.load %arg10[%188, %c0_81, %c0_82] : memref<8x2x512xf32, #tpu.memory_space<vmem>>, vector<1x2x512xf32>
    %190 = vector.shape_cast %189 : vector<1x2x512xf32> to vector<2x512xf32>
    %191 = arith.truncf %187 : vector<2x128xf32> to vector<2x128xbf16>
    %c0_83 = arith.constant 0 : index
    %c0_84 = arith.constant 0 : index
    %192 = vector.load %arg3[%c0_83, %c0_84] : memref<128x512xbf16, #tpu.memory_space<vmem>>, vector<128x512xbf16>
    %cst_85 = arith.constant dense<0.000000e+00> : vector<2x512xf32>
    %193 = tpu.matmul %191, %192, %cst_85 {dimension_numbers = #tpu.dot_dimension_numbers<[1], [0], [0], [1], [0, 0, 1, 1], [], []>} : vector<2x128xbf16>, vector<128x512xbf16>, vector<2x512xf32> -> vector<2x512xf32>
    %194 = arith.addf %190, %193 : vector<2x512xf32>
    %195 = math.tanh %194 : vector<2x512xf32>
    %196 = vector.extract_strided_slice %195 {offsets = [0, 0], sizes = [2, 128], strides = [1, 1]} : vector<2x512xf32> to vector<2x128xf32>
    %cst_86 = arith.constant 5.000000e-01 : f32
    %197 = vector.broadcast %cst_86 : f32 to vector<2x128xf32>
    %198 = arith.mulf %197, %196 : vector<2x128xf32>
    %cst_87 = arith.constant 5.000000e-01 : f32
    %199 = vector.broadcast %cst_87 : f32 to vector<2x128xf32>
    %200 = arith.addf %198, %199 : vector<2x128xf32>
    %201 = vector.extract_strided_slice %195 {offsets = [0, 128], sizes = [2, 128], strides = [1, 1]} : vector<2x512xf32> to vector<2x128xf32>
    %cst_88 = arith.constant 5.000000e-01 : f32
    %202 = vector.broadcast %cst_88 : f32 to vector<2x128xf32>
    %203 = arith.mulf %202, %201 : vector<2x128xf32>
    %cst_89 = arith.constant 5.000000e-01 : f32
    %204 = vector.broadcast %cst_89 : f32 to vector<2x128xf32>
    %205 = arith.addf %203, %204 : vector<2x128xf32>
    %206 = vector.extract_strided_slice %195 {offsets = [0, 256], sizes = [2, 128], strides = [1, 1]} : vector<2x512xf32> to vector<2x128xf32>
    %207 = vector.extract_strided_slice %195 {offsets = [0, 384], sizes = [2, 128], strides = [1, 1]} : vector<2x512xf32> to vector<2x128xf32>
    %cst_90 = arith.constant 5.000000e-01 : f32
    %208 = vector.broadcast %cst_90 : f32 to vector<2x128xf32>
    %209 = arith.mulf %208, %207 : vector<2x128xf32>
    %cst_91 = arith.constant 5.000000e-01 : f32
    %210 = vector.broadcast %cst_91 : f32 to vector<2x128xf32>
    %211 = arith.addf %209, %210 : vector<2x128xf32>
    %212 = arith.mulf %205, %185 : vector<2x128xf32>
    %213 = arith.mulf %200, %206 : vector<2x128xf32>
    %214 = arith.addf %212, %213 : vector<2x128xf32>
    %215 = math.tanh %214 : vector<2x128xf32>
    %216 = arith.mulf %211, %215 : vector<2x128xf32>
    %c7_i32 = arith.constant 7 : i32
    %217 = arith.index_cast %c7_i32 : i32 to index
    %c0_92 = arith.constant 0 : index
    %c0_93 = arith.constant 0 : index
    %218 = vector.load %arg10[%217, %c0_92, %c0_93] : memref<8x2x512xf32, #tpu.memory_space<vmem>>, vector<1x2x512xf32>
    %219 = vector.shape_cast %218 : vector<1x2x512xf32> to vector<2x512xf32>
    %220 = arith.truncf %216 : vector<2x128xf32> to vector<2x128xbf16>
    %c0_94 = arith.constant 0 : index
    %c0_95 = arith.constant 0 : index
    %221 = vector.load %arg3[%c0_94, %c0_95] : memref<128x512xbf16, #tpu.memory_space<vmem>>, vector<128x512xbf16>
    %cst_96 = arith.constant dense<0.000000e+00> : vector<2x512xf32>
    %222 = tpu.matmul %220, %221, %cst_96 {dimension_numbers = #tpu.dot_dimension_numbers<[1], [0], [0], [1], [0, 0, 1, 1], [], []>} : vector<2x128xbf16>, vector<128x512xbf16>, vector<2x512xf32> -> vector<2x512xf32>
    %223 = arith.addf %219, %222 : vector<2x512xf32>
    %224 = math.tanh %223 : vector<2x512xf32>
    %225 = vector.extract_strided_slice %224 {offsets = [0, 0], sizes = [2, 128], strides = [1, 1]} : vector<2x512xf32> to vector<2x128xf32>
    %cst_97 = arith.constant 5.000000e-01 : f32
    %226 = vector.broadcast %cst_97 : f32 to vector<2x128xf32>
    %227 = arith.mulf %226, %225 : vector<2x128xf32>
    %cst_98 = arith.constant 5.000000e-01 : f32
    %228 = vector.broadcast %cst_98 : f32 to vector<2x128xf32>
    %229 = arith.addf %227, %228 : vector<2x128xf32>
    %230 = vector.extract_strided_slice %224 {offsets = [0, 128], sizes = [2, 128], strides = [1, 1]} : vector<2x512xf32> to vector<2x128xf32>
    %cst_99 = arith.constant 5.000000e-01 : f32
    %231 = vector.broadcast %cst_99 : f32 to vector<2x128xf32>
    %232 = arith.mulf %231, %230 : vector<2x128xf32>
    %cst_100 = arith.constant 5.000000e-01 : f32
    %233 = vector.broadcast %cst_100 : f32 to vector<2x128xf32>
    %234 = arith.addf %232, %233 : vector<2x128xf32>
    %235 = vector.extract_strided_slice %224 {offsets = [0, 256], sizes = [2, 128], strides = [1, 1]} : vector<2x512xf32> to vector<2x128xf32>
    %236 = vector.extract_strided_slice %224 {offsets = [0, 384], sizes = [2, 128], strides = [1, 1]} : vector<2x512xf32> to vector<2x128xf32>
    %cst_101 = arith.constant 5.000000e-01 : f32
    %237 = vector.broadcast %cst_101 : f32 to vector<2x128xf32>
    %238 = arith.mulf %237, %236 : vector<2x128xf32>
    %cst_102 = arith.constant 5.000000e-01 : f32
    %239 = vector.broadcast %cst_102 : f32 to vector<2x128xf32>
    %240 = arith.addf %238, %239 : vector<2x128xf32>
    %241 = arith.mulf %234, %214 : vector<2x128xf32>
    %242 = arith.mulf %229, %235 : vector<2x128xf32>
    %243 = arith.addf %241, %242 : vector<2x128xf32>
    %244 = math.tanh %243 : vector<2x128xf32>
    %245 = arith.mulf %240, %244 : vector<2x128xf32>
    %c8_i32 = arith.constant 8 : i32
    %c0_103 = arith.constant 0 : index
    %c0_104 = arith.constant 0 : index
    %246 = vector.load %arg8[%c0_103, %c0_104] : memref<2x128xf32, #tpu.memory_space<vmem>>, vector<2x128xf32>
    tpu.vector_store %arg8[%c0_103, %c0_104], %245 {strides = array<i32>} : memref<2x128xf32, #tpu.memory_space<vmem>>, vector<2x128xf32>,
    %c0_105 = arith.constant 0 : index
    %c0_106 = arith.constant 0 : index
    %247 = vector.load %arg9[%c0_105, %c0_106] : memref<2x128xf32, #tpu.memory_space<vmem>>, vector<2x128xf32>
    tpu.vector_store %arg9[%c0_105, %c0_106], %243 {strides = array<i32>} : memref<2x128xf32, #tpu.memory_space<vmem>>, vector<2x128xf32>,
    %c0_i32_107 = arith.constant 0 : i32
    %248 = arith.cmpi eq, %arg0, %c0_i32_107 : i32
    %249 = arith.extui %248 : i1 to i32
    %c0_i32_108 = arith.constant 0 : i32
    %250 = arith.cmpi ne, %249, %c0_i32_108 : i32
    scf.if %250 {
      %251 = arith.truncf %245 : vector<2x128xf32> to vector<2x128xbf16>
      %c0_109 = arith.constant 0 : index
      %c0_110 = arith.constant 0 : index
      %252 = vector.load %arg5[%c0_109, %c0_110] : memref<128x128xbf16, #tpu.memory_space<vmem>>, vector<128x128xbf16>
      %cst_111 = arith.constant dense<0.000000e+00> : vector<2x128xf32>
      %253 = tpu.matmul %251, %252, %cst_111 {dimension_numbers = #tpu.dot_dimension_numbers<[1], [0], [0], [1], [0, 0, 1, 1], [], []>} : vector<2x128xbf16>, vector<128x128xbf16>, vector<2x128xf32> -> vector<2x128xf32>
      %c0_112 = arith.constant 0 : index
      %c0_113 = arith.constant 0 : index
      %254 = vector.load %arg6[%c0_112, %c0_113] : memref<1x128xf32, #tpu.memory_space<vmem>>, vector<1x128xf32>
      %255 = vector.broadcast %254 : vector<1x128xf32> to vector<2x128xf32>
      %256 = arith.addf %253, %255 : vector<2x128xf32>
      %cst_114 = arith.constant dense<0xFF800000> : vector<2xf32>
      %257 = vector.multi_reduction <maximumf>, %256, %cst_114 [1] : vector<2x128xf32> to vector<2xf32>
      %258 = vector.shape_cast %257 : vector<2xf32> to vector<2x1xf32>
      %259 = vector.broadcast %258 : vector<2x1xf32> to vector<2x128xf32>
      %260 = arith.subf %256, %259 : vector<2x128xf32>
      %261 = math.exp %260 : vector<2x128xf32>
      %cst_115 = arith.constant dense<0.000000e+00> : vector<2xf32>
      %262 = vector.multi_reduction <add>, %261, %cst_115 [1] : vector<2x128xf32> to vector<2xf32>
      %263 = vector.shape_cast %262 : vector<2xf32> to vector<2x1xf32>
      %264 = math.log %263 : vector<2x1xf32>
      %265 = vector.broadcast %264 : vector<2x1xf32> to vector<2x128xf32>
      %266 = arith.subf %260, %265 : vector<2x128xf32>
      %c0_116 = arith.constant 0 : index
      %c0_117 = arith.constant 0 : index
      %267 = vector.load %arg7[%c0_116, %c0_117] : memref<2x128xf32, #tpu.memory_space<vmem>>, vector<2x128xf32>
      tpu.vector_store %arg7[%c0_116, %c0_117], %266 {strides = array<i32>} : memref<2x128xf32, #tpu.memory_space<vmem>>, vector<2x128xf32>,
    } else {
    }
    return
  }
  func.func @transform_0(%arg0: i32) -> (i32, i32, i32) {
    %c0_i32 = arith.constant 0 : i32
    %c0_i32_0 = arith.constant 0 : i32
    %c0_i32_1 = arith.constant 0 : i32
    return %arg0, %c0_i32, %c0_i32_0 : i32, i32, i32
  }
  func.func @transform_1(%arg0: i32) -> (i32, i32) {
    %c0_i32 = arith.constant 0 : i32
    %c0_i32_0 = arith.constant 0 : i32
    %c0_i32_1 = arith.constant 0 : i32
    return %c0_i32, %c0_i32_0 : i32, i32
  }
  func.func @transform_2(%arg0: i32) -> (i32, i32) {
    %c0_i32 = arith.constant 0 : i32
    %c0_i32_0 = arith.constant 0 : i32
    %c0_i32_1 = arith.constant 0 : i32
    return %c0_i32, %c0_i32_0 : i32, i32
  }
  func.func @transform_3(%arg0: i32) -> (i32, i32) {
    %c0_i32 = arith.constant 0 : i32
    %c0_i32_0 = arith.constant 0 : i32
    %c0_i32_1 = arith.constant 0 : i32
    return %c0_i32, %c0_i32_0 : i32, i32
  }
  func.func @transform_4(%arg0: i32) -> (i32, i32) {
    %c0_i32 = arith.constant 0 : i32
    %c0_i32_0 = arith.constant 0 : i32
    %c0_i32_1 = arith.constant 0 : i32
    return %c0_i32, %c0_i32_0 : i32, i32
  }
  func.func @transform_5(%arg0: i32) -> (i32, i32) {
    %c0_i32 = arith.constant 0 : i32
    %c0_i32_0 = arith.constant 0 : i32
    %c0_i32_1 = arith.constant 0 : i32
    return %c0_i32, %c0_i32_0 : i32, i32
  }
  func.func @transform_6(%arg0: i32) -> (i32, i32) {
    %c0_i32 = arith.constant 0 : i32
    %c0_i32_0 = arith.constant 0 : i32
    %c0_i32_1 = arith.constant 0 : i32
    return %c0_i32, %c0_i32_0 : i32, i32
  }
}

</mosaic_0001>

<llo_original>
// kernel: tpu_custom_call.1
$region0: #{tpu_custom_call.1}
  #allocation0 [shape = 'u32[]', space=smem, size = 0x4, offset = 0x4, fixed_abs, tag = 'smem constant byte address 0x4 - core index']
  #allocation1 [shape = 'u32[72,128]{1,0:T(1,128)}', space=vmem, size = 0x9000, scoped, tag = 'internal scratch']
  #allocation2 [shape = 'f32[2,128]{1,0:T(2,128)}', space=vmem, size = 0x400, scoped, tag = 'scratch operand']
  #allocation3 [shape = 'f32[2,128]{1,0:T(2,128)}', space=vmem, size = 0x400, scoped, tag = 'scratch operand']
  #allocation4 [shape = 'f32[8,2,512]{2,1,0:T(2,128)}', space=vmem, size = 0x8000, scoped, tag = 'scratch operand']
  %s0 = inlined_call_operand.hbm [shape: bf16[8,2,16], index: 0, kind: input, shape index: {}]
  %s1 = inlined_call_operand.hbm [shape: bf16[16,512], index: 1, kind: input, shape index: {}]
  %s2 = inlined_call_operand.hbm [shape: bf16[128,512], index: 2, kind: input, shape index: {}]
  %s3 = inlined_call_operand.hbm [shape: f32[1,512], index: 3, kind: input, shape index: {}]
  %s4 = inlined_call_operand.hbm [shape: bf16[128,128], index: 4, kind: input, shape index: {}]
  %s5 = inlined_call_operand.vmem [shape: f32[1,128], index: 5, kind: input, shape index: {}]
  %s6 = inlined_call_operand.hbm [shape: f32[2,128], index: 6, kind: output, shape index: {}]
  %s7 = sld [smem:[#allocation0]]
  $region62: #{tpu_custom_call.1} parent=0
    _
  %s9 = ssub.s32 1, %s7
  %s10 = scalar_select 0, %s9, %s7
  $region1: #{tpu_custom_call.1} parent=0
    #allocation5 [shape = 'u8[4096]{0}', space=vmem, size = 0x1000, scoped, tag = 'input window, operand 0, single buffered']
    #allocation6 [shape = 's32[1]{0}', space=sflag, size = 0x4, scoped, tag = 'scoped memory for tpu_custom_call.1']
    #allocation7 [shape = 's32[1]{0}', space=sflag, size = 0x4, scoped, tag = 'scoped memory for tpu_custom_call.1']
    #allocation8 [shape = 'u8[16384]{0}', space=vmem, size = 0x4000, scoped, tag = 'input window, operand 1, single buffered']
    #allocation9 [shape = 's32[1]{0}', space=sflag, size = 0x4, scoped, tag = 'scoped memory for tpu_custom_call.1']
    #allocation10 [shape = 'u8[131072]{0}', space=vmem, size = 0x20000, scoped, tag = 'input window, operand 2, single buffered']
    #allocation11 [shape = 'u8[2048]{0}', space=vmem, size = 0x800, scoped, tag = 'input window, operand 3, single buffered']
    #allocation12 [shape = 's32[1]{0}', space=sflag, size = 0x4, scoped, tag = 'scoped memory for tpu_custom_call.1']
    #allocation13 [shape = 'u8[32768]{0}', space=vmem, size = 0x8000, scoped, tag = 'input window, operand 4, single buffered']
    #allocation14 [shape = 'u8[1024]{0}', space=vmem, size = 0x400, scoped, tag = 'output window, operand 0, single buffered']
    %11 = vsyncpa [#allocation6], 0
    %12 = vsyncpa [#allocation9], 0
    %13 = vsyncpa [#allocation12], 0
    %14 = vsyncpa [#allocation7], 0
    // Predicated region
    $region2: #{tpu_custom_call.1} parent=1 // pred_check
      _
    $region3: #{tpu_custom_call.1} parent=1 // pred_check_branch
      %16 = sbr.rel (0) target = $region5
    $region4: #{tpu_custom_call.1} parent=1 // pred_region
      %18 = vsyncadd [#allocation6], 0
      %s19 = sshll.u32 %s0, 4
      %s20 = int_to_ptr.hbm [resolvable:$true] %s19
      %s21 = sshll.u32 [#allocation5], 4
      %s22 = int_to_ptr.vmem [resolvable:$true] %s21
      %27 = dma.hbm_to_vmem [thread:$0]  %s20, 128, %s22, [#allocation6], 16, 16, 1
    $region5: #{tpu_custom_call.1} parent=1 // pred_fallthru
      _
    // Predicated region
    $region6: #{tpu_custom_call.1} parent=1 // pred_check
      _
    $region7: #{tpu_custom_call.1} parent=1 // pred_check_branch
      %29 = sbr.rel (0) target = $region9
    $region8: #{tpu_custom_call.1} parent=1 // pred_region
      %31 = vsyncadd [#allocation9], 0
      %s32 = sshll.u32 %s1, 4
      %s33 = int_to_ptr.hbm [resolvable:$true] %s32
      %s34 = sshll.u32 [#allocation8], 4
      %s35 = int_to_ptr.vmem [resolvable:$true] %s34
      %40 = dma.hbm_to_vmem [thread:$0]  %s33, 512, %s35, [#allocation9], 256, 256, 16
    $region9: #{tpu_custom_call.1} parent=1 // pred_fallthru
      _
    // Predicated region
    $region10: #{tpu_custom_call.1} parent=1 // pred_check
      _
    $region11: #{tpu_custom_call.1} parent=1 // pred_check_branch
      %42 = sbr.rel (0) target = $region13
    $region12: #{tpu_custom_call.1} parent=1 // pred_region
      %44 = vsyncadd [#allocation9], 0
      %s45 = sshll.u32 %s2, 4
      %s46 = int_to_ptr.hbm [resolvable:$true] %s45
      %s47 = sshll.u32 [#allocation10], 4
      %s48 = int_to_ptr.vmem [resolvable:$true] %s47
      %53 = dma.hbm_to_vmem [thread:$0]  %s46, 4096, %s48, [#allocation9], 256, 256, 16
    $region13: #{tpu_custom_call.1} parent=1 // pred_fallthru
      _
    // Predicated region
    $region14: #{tpu_custom_call.1} parent=1 // pred_check
      _
    $region15: #{tpu_custom_call.1} parent=1 // pred_check_branch
      %55 = sbr.rel (0) target = $region17
    $region16: #{tpu_custom_call.1} parent=1 // pred_region
      %57 = vsyncadd [#allocation12], 0
      %s59 = sshll.u32 %s3, 4
      %s60 = int_to_ptr.hbm [resolvable:$true] %s59
      %s61 = sshll.u32 [#allocation11], 4
      %s62 = int_to_ptr.vmem [resolvable:$true] %s61
      %64 = dma.hbm_to_vmem [thread:$0]  %s60, 64, %s62, [#allocation12]
    $region17: #{tpu_custom_call.1} parent=1 // pred_fallthru
      _
    // Predicated region
    $region18: #{tpu_custom_call.1} parent=1 // pred_check
      _
    $region19: #{tpu_custom_call.1} parent=1 // pred_check_branch
      %66 = sbr.rel (0) target = $region21
    $region20: #{tpu_custom_call.1} parent=1 // pred_region
      %68 = vsyncadd [#allocation12], 0
      %s69 = sshll.u32 %s4, 4
      %s70 = int_to_ptr.hbm [resolvable:$true] %s69
      %s71 = sshll.u32 [#allocation13], 4
      %s72 = int_to_ptr.vmem [resolvable:$true] %s71
      %77 = dma.hbm_to_vmem [thread:$0]  %s70, 1024, %s72, [#allocation12], 64, 64, 4
    $region21: #{tpu_custom_call.1} parent=1 // pred_fallthru
      _
    // Predicated region
    $region22: #{tpu_custom_call.1} parent=1 // pred_check
      _
    $region23: #{tpu_custom_call.1} parent=1 // pred_check_branch
      %79 = sbr.rel (0) target = $region25
    $region24: #{tpu_custom_call.1} parent=1 // pred_region
      _
    $region25: #{tpu_custom_call.1} parent=1 // pred_fallthru
      _
    // Predicated region
    $region26: #{tpu_custom_call.1} parent=1 // pred_check
      _
    $region27: #{tpu_custom_call.1} parent=1 // pred_check_branch
      %81 = sbr.rel (0) target = $region29
    $region28: #{tpu_custom_call.1} parent=1 // pred_region
      %83 = dma.done [#allocation6], 128
    $region29: #{tpu_custom_call.1} parent=1 // pred_fallthru
      _
    // Predicated region
    $region30: #{tpu_custom_call.1} parent=1 // pred_check
      _
    $region31: #{tpu_custom_call.1} parent=1 // pred_check_branch
      %85 = sbr.rel (0) target = $region33
    $region32: #{tpu_custom_call.1} parent=1 // pred_region
      %87 = dma.done [#allocation9], 512
    $region33: #{tpu_custom_call.1} parent=1 // pred_fallthru
      _
    // Predicated region
    $region34: #{tpu_custom_call.1} parent=1 // pred_check
      _
    $region35: #{tpu_custom_call.1} parent=1 // pred_check_branch
      %89 = sbr.rel (0) target = $region37
    $region36: #{tpu_custom_call.1} parent=1 // pred_region
      %91 = dma.done [#allocation9], 4096
    $region37: #{tpu_custom_call.1} parent=1 // pred_fallthru
      _
    // Predicated region
    $region38: #{tpu_custom_call.1} parent=1 // pred_check
      _
    $region39: #{tpu_custom_call.1} parent=1 // pred_check_branch
      %93 = sbr.rel (0) target = $region41
    $region40: #{tpu_custom_call.1} parent=1 // pred_region
      %95 = dma.done [#allocation12], 64
    $region41: #{tpu_custom_call.1} parent=1 // pred_fallthru
      _
    // Predicated region
    $region42: #{tpu_custom_call.1} parent=1 // pred_check
      _
    $region43: #{tpu_custom_call.1} parent=1 // pred_check_branch
      %97 = sbr.rel (0) target = $region45
    $region44: #{tpu_custom_call.1} parent=1 // pred_region
      %99 = dma.done [#allocation12], 1024
    $region45: #{tpu_custom_call.1} parent=1 // pred_fallthru
      _
    %p101 = scmp.eq.s32.totalorder 0, 0
    // Predicated region
    $region46: #{tpu_custom_call.1} parent=1 // pred_check
      %p102 = pneg %p101
    $region47: #{tpu_custom_call.1} parent=1 // pred_check_branch
      %104 = sbr.rel (%p102) target = $region49
    $region48: #{tpu_custom_call.1} parent=1 // pred_region
      %105 = vst [vmem:[#allocation2] sm:$0x3] 0.0
      %106 = vst [vmem:[#allocation3] sm:$0x3] 0.0
    $region49: #{tpu_custom_call.1} parent=1 // pred_fallthru
      _
    %v107 = vld [vmem:[#allocation5] sm:$0x1]
    %v108 = vld [vmem:[#allocation5 + $0x1] sm:$0x1]
    %v109 = vld [vmem:[#allocation5 + $0x2] sm:$0x1]
    %v110 = vld [vmem:[#allocation5 + $0x3] sm:$0x1]
    %v111 = vld [vmem:[#allocation5 + $0x4] sm:$0x1]
    %v112 = vld [vmem:[#allocation5 + $0x5] sm:$0x1]
    %v113 = vld [vmem:[#allocation5 + $0x6] sm:$0x1]
    %v114 = vld [vmem:[#allocation5 + $0x7] sm:$0x1]
    %v115 = vld [vmem:[#allocation8] sm:$0xff]
    %v116 = vld [vmem:[#allocation8 + $0x8] sm:$0xff]
    %v117 = vld [vmem:[#allocation8 + $0x10] sm:$0xff]
    %v118 = vld [vmem:[#allocation8 + $0x18] sm:$0xff]
    %v119 = vld [vmem:[#allocation11] sm:$0xf]
    %v121 = vperm.slane %v119, 0
    %v122 = vperm.slane %v119, 1
    %v123 = vperm.slane %v119, 2
    %v124 = vperm.slane %v119, 3
    %130 = vst [vmem:[#allocation1] ss:$9 sm:$0xff] %v107
    %s132 = scalar_lea.vmem [#allocation1], 1
    %133 = vst [vmem:[%s132] ss:$9 sm:$0xff] %v108
    %s135 = scalar_lea.vmem [#allocation1], 2
    %136 = vst [vmem:[%s135] ss:$9 sm:$0xff] %v109
    %s138 = scalar_lea.vmem [#allocation1], 3
    %139 = vst [vmem:[%s138] ss:$9 sm:$0xff] %v110
    %s141 = scalar_lea.vmem [#allocation1], 4
    %142 = vst [vmem:[%s141] ss:$9 sm:$0xff] %v111
    %s144 = scalar_lea.vmem [#allocation1], 5
    %145 = vst [vmem:[%s144] ss:$9 sm:$0xff] %v112
    %s147 = scalar_lea.vmem [#allocation1], 6
    %148 = vst [vmem:[%s147] ss:$9 sm:$0xff] %v113
    %s150 = scalar_lea.vmem [#allocation1], 7
    %151 = vst [vmem:[%s150] ss:$9 sm:$0xff] %v114
    %v152 = vld [vmem:[#allocation1] sm:$0xff]
    %v157 = vunpack.c.l.b16 %v115
    %v158 = vunpack.c.h.b16 %v115
    %v159 = vunpack.c.l.b16 %v116
    %v160 = vunpack.c.h.b16 %v116
    %v161 = vunpack.c.l.b16 %v117
    %v162 = vunpack.c.h.b16 %v117
    %v163 = vunpack.c.l.b16 %v118
    %v164 = vunpack.c.h.b16 %v118
    %v165 = vpack.c.b16 %v161, %v157
    %v166 = vpack.c.b16 %v162, %v158
    %v167 = vpack.c.b16 %v163, %v159
    %v168 = vpack.c.b16 %v164, %v160
    %vm173 = vcmask 130048
    %v174 = vsel %vm173, %v152, 0
    %176 = vmatpush.bf16.msra.mxu0 0
    %177 = vmatpush.bf16.msra.mxu0 0
    %178 = vmatpush.bf16.msra.mxu0 0
    %179 = vmatpush.bf16.msra.mxu0 0
    %180 = vmatpush.bf16.msra.mxu0 0
    %181 = vmatpush.bf16.msra.mxu0 0
    %182 = vmatpush.bf16.msra.mxu0 0
    %183 = vmatpush.bf16.msra.mxu0 %v165
    %184 = vmatmul.bf16.gmra.mxu0 %v174
    %v185 = vpop.f32.mrf.mxu0
    %v186 = vadd.f32 %v121, %v185
    %v187 = vpop.f32.mrf.mxu0
    %v188 = vadd.f32 %v121, %v187
    %189 = vdwg.mxu0
    %190 = vmatpush.bf16.msra.mxu0 0
    %191 = vmatpush.bf16.msra.mxu0 0
    %192 = vmatpush.bf16.msra.mxu0 0
    %193 = vmatpush.bf16.msra.mxu0 0
    %194 = vmatpush.bf16.msra.mxu0 0
    %195 = vmatpush.bf16.msra.mxu0 0
    %196 = vmatpush.bf16.msra.mxu0 0
    %197 = vmatpush.bf16.msra.mxu0 %v166
    %198 = vmatmul.bf16.gmra.mxu0 %v174
    %v199 = vpop.f32.mrf.mxu0
    %v200 = vadd.f32 %v122, %v199
    %v201 = vpop.f32.mrf.mxu0
    %v202 = vadd.f32 %v122, %v201
    %203 = vdwg.mxu0
    %204 = vmatpush.bf16.msra.mxu0 0
    %205 = vmatpush.bf16.msra.mxu0 0
    %206 = vmatpush.bf16.msra.mxu0 0
    %207 = vmatpush.bf16.msra.mxu0 0
    %208 = vmatpush.bf16.msra.mxu0 0
    %209 = vmatpush.bf16.msra.mxu0 0
    %210 = vmatpush.bf16.msra.mxu0 0
    %211 = vmatpush.bf16.msra.mxu0 %v167
    %212 = vmatmul.bf16.gmra.mxu0 %v174
    %v213 = vpop.f32.mrf.mxu0
    %v214 = vadd.f32 %v123, %v213
    %v215 = vpop.f32.mrf.mxu0
    %v216 = vadd.f32 %v123, %v215
    %217 = vdwg.mxu0
    %218 = vmatpush.bf16.msra.mxu0 0
    %219 = vmatpush.bf16.msra.mxu0 0
    %220 = vmatpush.bf16.msra.mxu0 0
    %221 = vmatpush.bf16.msra.mxu0 0
    %222 = vmatpush.bf16.msra.mxu0 0
    %223 = vmatpush.bf16.msra.mxu0 0
    %224 = vmatpush.bf16.msra.mxu0 0
    %225 = vmatpush.bf16.msra.mxu0 %v168
    %226 = vmatmul.bf16.gmra.mxu0 %v174
    %v227 = vpop.f32.mrf.mxu0
    %v228 = vadd.f32 %v124, %v227
    %v229 = vpop.f32.mrf.mxu0
    %v230 = vadd.f32 %v124, %v229
    %231 = vdwg.mxu0
    %v240 = vrot.slane %v200, 6
    %v241 = vrot.slane %v214, 4
    %v242 = vrot.slane %v228, 2
    %v243 = vrot.slane %v202, 6
    %v244 = vrot.slane %v216, 4
    %v245 = vrot.slane %v230, 2
    %vm246 = vcmask 1041408
    %v247 = vsel %vm246, %v186, %v240
    %vm248 = vcmask 1045508
    %v249 = vsel %vm248, %v241, %v242
    %vm250 = vcmask 1043456
    %v251 = vsel %vm250, %v247, %v249
    %vm252 = vcmask 1043458
    %v253 = vsel %vm252, %v186, %v240
    %vm254 = vcmask 1045504
    %v255 = vsel %vm254, %v242, %v241
    %vm256 = vcmask 1045506
    %v257 = vsel %vm256, %v253, %v255
    %v258 = vrot.slane %v257, 2
    %v259 = vsel %vm248, %v186, %v240
    %v260 = vsel %vm246, %v241, %v242
    %v261 = vsel %vm250, %v260, %v259
    %v262 = vrot.slane %v261, 4
    %v263 = vsel %vm254, %v240, %v186
    %v264 = vsel %vm252, %v241, %v242
    %v265 = vsel %vm256, %v264, %v263
    %v266 = vrot.slane %v265, 6
    %v267 = vsel %vm246, %v188, %v243
    %v268 = vsel %vm248, %v244, %v245
    %v269 = vsel %vm250, %v267, %v268
    %v270 = vsel %vm252, %v188, %v243
    %v271 = vsel %vm254, %v245, %v244
    %v272 = vsel %vm256, %v270, %v271
    %v273 = vrot.slane %v272, 2
    %v274 = vsel %vm248, %v188, %v243
    %v275 = vsel %vm246, %v244, %v245
    %v276 = vsel %vm250, %v275, %v274
    %v277 = vrot.slane %v276, 4
    %v278 = vsel %vm254, %v243, %v188
    %v279 = vsel %vm252, %v244, %v245
    %v280 = vsel %vm256, %v279, %v278
    %v281 = vrot.slane %v280, 6
    %290 = vst [vmem:[#allocation4] sm:$0xff] %v251
    %291 = vst [vmem:[#allocation4 + $0x8] sm:$0xff] %v258
    %292 = vst [vmem:[#allocation4 + $0x10] sm:$0xff] %v262
    %293 = vst [vmem:[#allocation4 + $0x18] sm:$0xff] %v266
    %294 = vst [vmem:[#allocation4 + $0x20] sm:$0xff] %v269
    %295 = vst [vmem:[#allocation4 + $0x28] sm:$0xff] %v273
    %296 = vst [vmem:[#allocation4 + $0x30] sm:$0xff] %v277
    %297 = vst [vmem:[#allocation4 + $0x38] sm:$0xff] %v281
    %v298 = vld [vmem:[#allocation2] sm:$0x3]
    %v299 = vld [vmem:[#allocation3] sm:$0x3]
    %v300 = vld [vmem:[#allocation4] sm:$0xff]
    %v301 = vpack.c.bf16 %v298, %v298
    %v302 = vld [vmem:[#allocation10] sm:$0xff]
    %v303 = vld [vmem:[#allocation10 + $0x8] sm:$0xff]
    %v304 = vld [vmem:[#allocation10 + $0x10] sm:$0xff]
    %v305 = vld [vmem:[#allocation10 + $0x18] sm:$0xff]
    %v306 = vld [vmem:[#allocation10 + $0x20] sm:$0xff]
    %v307 = vld [vmem:[#allocation10 + $0x28] sm:$0xff]
    %v308 = vld [vmem:[#allocation10 + $0x30] sm:$0xff]
    %v309 = vld [vmem:[#allocation10 + $0x38] sm:$0xff]
    %v310 = vld [vmem:[#allocation10 + $0x40] sm:$0xff]
    %v311 = vld [vmem:[#allocation10 + $0x48] sm:$0xff]
    %v312 = vld [vmem:[#allocation10 + $0x50] sm:$0xff]
    %v313 = vld [vmem:[#allocation10 + $0x58] sm:$0xff]
    %v314 = vld [vmem:[#allocation10 + $0x60] sm:$0xff]
    %v315 = vld [vmem:[#allocation10 + $0x68] sm:$0xff]
    %v316 = vld [vmem:[#allocation10 + $0x70] sm:$0xff]
    %v317 = vld [vmem:[#allocation10 + $0x78] sm:$0xff]
    %v318 = vld [vmem:[#allocation10 + $0x80] sm:$0xff]
    %v319 = vld [vmem:[#allocation10 + $0x88] sm:$0xff]
    %v320 = vld [vmem:[#allocation10 + $0x90] sm:$0xff]
    %v321 = vld [vmem:[#allocation10 + $0x98] sm:$0xff]
    %v322 = vld [vmem:[#allocation10 + $0xa0] sm:$0xff]
    %v323 = vld [vmem:[#allocation10 + $0xa8] sm:$0xff]
    %v324 = vld [vmem:[#allocation10 + $0xb0] sm:$0xff]
    %v325 = vld [vmem:[#allocation10 + $0xb8] sm:$0xff]
    %v326 = vld [vmem:[#allocation10 + $0xc0] sm:$0xff]
    %v327 = vld [vmem:[#allocation10 + $0xc8] sm:$0xff]
    %v328 = vld [vmem:[#allocation10 + $0xd0] sm:$0xff]
    %v329 = vld [vmem:[#allocation10 + $0xd8] sm:$0xff]
    %v330 = vld [vmem:[#allocation10 + $0xe0] sm:$0xff]
    %v331 = vld [vmem:[#allocation10 + $0xe8] sm:$0xff]
    %v332 = vld [vmem:[#allocation10 + $0xf0] sm:$0xff]
    %v333 = vld [vmem:[#allocation10 + $0xf8] sm:$0xff]
    %v366 = vunpack.c.l.b16 %v302
    %v367 = vunpack.c.h.b16 %v302
    %v368 = vunpack.c.l.b16 %v303
    %v369 = vunpack.c.h.b16 %v303
    %v370 = vunpack.c.l.b16 %v304
    %v371 = vunpack.c.h.b16 %v304
    %v372 = vunpack.c.l.b16 %v305
    %v373 = vunpack.c.h.b16 %v305
    %v374 = vunpack.c.l.b16 %v306
    %v375 = vunpack.c.h.b16 %v306
    %v376 = vunpack.c.l.b16 %v307
    %v377 = vunpack.c.h.b16 %v307
    %v378 = vunpack.c.l.b16 %v308
    %v379 = vunpack.c.h.b16 %v308
    %v380 = vunpack.c.l.b16 %v309
    %v381 = vunpack.c.h.b16 %v309
    %v382 = vunpack.c.l.b16 %v310
    %v383 = vunpack.c.h.b16 %v310
    %v384 = vunpack.c.l.b16 %v311
    %v385 = vunpack.c.h.b16 %v311
    %v386 = vunpack.c.l.b16 %v312
    %v387 = vunpack.c.h.b16 %v312
    %v388 = vunpack.c.l.b16 %v313
    %v389 = vunpack.c.h.b16 %v313
    %v390 = vunpack.c.l.b16 %v314
    %v391 = vunpack.c.h.b16 %v314
    %v392 = vunpack.c.l.b16 %v315
    %v393 = vunpack.c.h.b16 %v315
    %v394 = vunpack.c.l.b16 %v316
    %v395 = vunpack.c.h.b16 %v316
    %v396 = vunpack.c.l.b16 %v317
    %v397 = vunpack.c.h.b16 %v317
    %v398 = vunpack.c.l.b16 %v318
    %v399 = vunpack.c.h.b16 %v318
    %v400 = vunpack.c.l.b16 %v319
    %v401 = vunpack.c.h.b16 %v319
    %v402 = vunpack.c.l.b16 %v320
    %v403 = vunpack.c.h.b16 %v320
    %v404 = vunpack.c.l.b16 %v321
    %v405 = vunpack.c.h.b16 %v321
    %v406 = vunpack.c.l.b16 %v322
    %v407 = vunpack.c.h.b16 %v322
    %v408 = vunpack.c.l.b16 %v323
    %v409 = vunpack.c.h.b16 %v323
    %v410 = vunpack.c.l.b16 %v324
    %v411 = vunpack.c.h.b16 %v324
    %v412 = vunpack.c.l.b16 %v325
    %v413 = vunpack.c.h.b16 %v325
    %v414 = vunpack.c.l.b16 %v326
    %v415 = vunpack.c.h.b16 %v326
    %v416 = vunpack.c.l.b16 %v327
    %v417 = vunpack.c.h.b16 %v327
    %v418 = vunpack.c.l.b16 %v328
    %v419 = vunpack.c.h.b16 %v328
    %v420 = vunpack.c.l.b16 %v329
    %v421 = vunpack.c.h.b16 %v329
    %v422 = vunpack.c.l.b16 %v330
    %v423 = vunpack.c.h.b16 %v330
    %v424 = vunpack.c.l.b16 %v331
    %v425 = vunpack.c.h.b16 %v331
    %v426 = vunpack.c.l.b16 %v332
    %v427 = vunpack.c.h.b16 %v332
    %v428 = vunpack.c.l.b16 %v333
    %v429 = vunpack.c.h.b16 %v333
    %v430 = vpack.c.b16 %v370, %v366
    %v431 = vpack.c.b16 %v371, %v367
    %v432 = vpack.c.b16 %v372, %v368
    %v433 = vpack.c.b16 %v373, %v369
    %v434 = vpack.c.b16 %v378, %v374
    %v435 = vpack.c.b16 %v379, %v375
    %v436 = vpack.c.b16 %v380, %v376
    %v437 = vpack.c.b16 %v381, %v377
    %v438 = vpack.c.b16 %v386, %v382
    %v439 = vpack.c.b16 %v387, %v383
    %v440 = vpack.c.b16 %v388, %v384
    %v441 = vpack.c.b16 %v389, %v385
    %v442 = vpack.c.b16 %v394, %v390
    %v443 = vpack.c.b16 %v395, %v391
    %v444 = vpack.c.b16 %v396, %v392
    %v445 = vpack.c.b16 %v397, %v393
    %v446 = vpack.c.b16 %v402, %v398
    %v447 = vpack.c.b16 %v403, %v399
    %v448 = vpack.c.b16 %v404, %v400
    %v449 = vpack.c.b16 %v405, %v401
    %v450 = vpack.c.b16 %v410, %v406
    %v451 = vpack.c.b16 %v411, %v407
    %v452 = vpack.c.b16 %v412, %v408
    %v453 = vpack.c.b16 %v413, %v409
    %v454 = vpack.c.b16 %v418, %v414
    %v455 = vpack.c.b16 %v419, %v415
    %v456 = vpack.c.b16 %v420, %v416
    %v457 = vpack.c.b16 %v421, %v417
    %v458 = vpack.c.b16 %v426, %v422
    %v459 = vpack.c.b16 %v427, %v423
    %v460 = vpack.c.b16 %v428, %v424
    %v461 = vpack.c.b16 %v429, %v425
    %494 = vmatpush.bf16.msra.mxu0 %v458
    %495 = vmatpush.bf16.msra.mxu0 %v454
    %496 = vmatpush.bf16.msra.mxu0 %v450
    %497 = vmatpush.bf16.msra.mxu0 %v446
    %498 = vmatpush.bf16.msra.mxu0 %v442
    %499 = vmatpush.bf16.msra.mxu0 %v438
    %500 = vmatpush.bf16.msra.mxu0 %v434
    %501 = vmatpush.bf16.msra.mxu0 %v430
    %502 = vmatmul.bf16.gmra.mxu0 %v301
    %v503 = vpop.f32.mrf.mxu0
    %v504 = vadd.f32 0.0, %v503
    %v505 = vpop.f32.mrf.mxu0
    %506 = vdwg.mxu0
    %507 = vmatpush.bf16.msra.mxu0 %v459
    %508 = vmatpush.bf16.msra.mxu0 %v455
    %509 = vmatpush.bf16.msra.mxu0 %v451
    %510 = vmatpush.bf16.msra.mxu0 %v447
    %511 = vmatpush.bf16.msra.mxu0 %v443
    %512 = vmatpush.bf16.msra.mxu0 %v439
    %513 = vmatpush.bf16.msra.mxu0 %v435
    %514 = vmatpush.bf16.msra.mxu0 %v431
    %515 = vmatmul.bf16.gmra.mxu0 %v301
    %v516 = vpop.f32.mrf.mxu0
    %v517 = vadd.f32 0.0, %v516
    %v518 = vpop.f32.mrf.mxu0
    %519 = vdwg.mxu0
    %520 = vmatpush.bf16.msra.mxu0 %v460
    %521 = vmatpush.bf16.msra.mxu0 %v456
    %522 = vmatpush.bf16.msra.mxu0 %v452
    %523 = vmatpush.bf16.msra.mxu0 %v448
    %524 = vmatpush.bf16.msra.mxu0 %v444
    %525 = vmatpush.bf16.msra.mxu0 %v440
    %526 = vmatpush.bf16.msra.mxu0 %v436
    %527 = vmatpush.bf16.msra.mxu0 %v432
    %528 = vmatmul.bf16.gmra.mxu0 %v301
    %v529 = vpop.f32.mrf.mxu0
    %v530 = vadd.f32 0.0, %v529
    %v531 = vpop.f32.mrf.mxu0
    %532 = vdwg.mxu0
    %533 = vmatpush.bf16.msra.mxu0 %v461
    %534 = vmatpush.bf16.msra.mxu0 %v457
    %535 = vmatpush.bf16.msra.mxu0 %v453
    %536 = vmatpush.bf16.msra.mxu0 %v449
    %537 = vmatpush.bf16.msra.mxu0 %v445
    %538 = vmatpush.bf16.msra.mxu0 %v441
    %539 = vmatpush.bf16.msra.mxu0 %v437
    %540 = vmatpush.bf16.msra.mxu0 %v433
    %541 = vmatmul.bf16.gmra.mxu0 %v301
    %v542 = vpop.f32.mrf.mxu0
    %v543 = vadd.f32 0.0, %v542
    %v544 = vpop.f32.mrf.mxu0
    %545 = vdwg.mxu0
    %v550 = vrot.slane %v517, 6
    %v551 = vrot.slane %v530, 4
    %v552 = vrot.slane %v543, 2
    %v553 = vsel %vm246, %v504, %v550
    %v554 = vsel %vm248, %v551, %v552
    %v555 = vsel %vm250, %v553, %v554
    %v557 = vadd.f32 %v300, %v555
    %v558 = vtanh.pop %v557
    %v559 = vmul.f32 %v558, 0.5
    %v560 = vadd.f32 %v559, 0.5
    %v562 = vrot.slane %v558, 2
    %v564 = vmul.f32 %v562, 0.5
    %v565 = vadd.f32 %v564, 0.5
    %v566 = vrot.slane %v558, 6
    %v568 = vmul.f32 %v566, 0.5
    %v569 = vadd.f32 %v568, 0.5
    %v570 = vmul.f32 %v565, %v299
    %v571 = vrot.slane %v558, 4
    %v573 = vmul.f32 %v560, %v571
    %v574 = vadd.f32 %v570, %v573
    %v575 = vtanh.pop %v574
    %v576 = vmul.f32 %v569, %v575
    %s577 = scalar_lea.vmem [#allocation4], 8
    %v578 = vld [vmem:[%s577] sm:$0xff]
    %v579 = vpack.c.bf16 %v576, %v576
    %580 = vmatpush.bf16.msra.mxu0 %v458
    %581 = vmatpush.bf16.msra.mxu0 %v454
    %582 = vmatpush.bf16.msra.mxu0 %v450
    %583 = vmatpush.bf16.msra.mxu0 %v446
    %584 = vmatpush.bf16.msra.mxu0 %v442
    %585 = vmatpush.bf16.msra.mxu0 %v438
    %586 = vmatpush.bf16.msra.mxu0 %v434
    %587 = vmatpush.bf16.msra.mxu0 %v430
    %588 = vmatmul.bf16.gmra.mxu0 %v579
    %v589 = vpop.f32.mrf.mxu0
    %v590 = vadd.f32 0.0, %v589
    %v591 = vpop.f32.mrf.mxu0
    %592 = vdwg.mxu0
    %593 = vmatpush.bf16.msra.mxu0 %v459
    %594 = vmatpush.bf16.msra.mxu0 %v455
    %595 = vmatpush.bf16.msra.mxu0 %v451
    %596 = vmatpush.bf16.msra.mxu0 %v447
    %597 = vmatpush.bf16.msra.mxu0 %v443
    %598 = vmatpush.bf16.msra.mxu0 %v439
    %599 = vmatpush.bf16.msra.mxu0 %v435
    %600 = vmatpush.bf16.msra.mxu0 %v431
    %601 = vmatmul.bf16.gmra.mxu0 %v579
    %v602 = vpop.f32.mrf.mxu0
    %v603 = vadd.f32 0.0, %v602
    %v604 = vpop.f32.mrf.mxu0
    %605 = vdwg.mxu0
    %606 = vmatpush.bf16.msra.mxu0 %v460
    %607 = vmatpush.bf16.msra.mxu0 %v456
    %608 = vmatpush.bf16.msra.mxu0 %v452
    %609 = vmatpush.bf16.msra.mxu0 %v448
    %610 = vmatpush.bf16.msra.mxu0 %v444
    %611 = vmatpush.bf16.msra.mxu0 %v440
    %612 = vmatpush.bf16.msra.mxu0 %v436
    %613 = vmatpush.bf16.msra.mxu0 %v432
    %614 = vmatmul.bf16.gmra.mxu0 %v579
    %v615 = vpop.f32.mrf.mxu0
    %v616 = vadd.f32 0.0, %v615
    %v617 = vpop.f32.mrf.mxu0
    %618 = vdwg.mxu0
    %619 = vmatpush.bf16.msra.mxu0 %v461
    %620 = vmatpush.bf16.msra.mxu0 %v457
    %621 = vmatpush.bf16.msra.mxu0 %v453
    %622 = vmatpush.bf16.msra.mxu0 %v449
    %623 = vmatpush.bf16.msra.mxu0 %v445
    %624 = vmatpush.bf16.msra.mxu0 %v441
    %625 = vmatpush.bf16.msra.mxu0 %v437
    %626 = vmatpush.bf16.msra.mxu0 %v433
    %627 = vmatmul.bf16.gmra.mxu0 %v579
    %v628 = vpop.f32.mrf.mxu0
    %v629 = vadd.f32 0.0, %v628
    %v630 = vpop.f32.mrf.mxu0
    %631 = vdwg.mxu0
    %v636 = vrot.slane %v603, 6
    %v637 = vrot.slane %v616, 4
    %v638 = vrot.slane %v629, 2
    %v639 = vsel %vm246, %v590, %v636
    %v640 = vsel %vm248, %v637, %v638
    %v641 = vsel %vm250, %v639, %v640
    %v643 = vadd.f32 %v578, %v641
    %v644 = vtanh.pop %v643
    %v645 = vmul.f32 %v644, 0.5
    %v646 = vadd.f32 %v645, 0.5
    %v648 = vrot.slane %v644, 2
    %v650 = vmul.f32 %v648, 0.5
    %v651 = vadd.f32 %v650, 0.5
    %v652 = vrot.slane %v644, 6
    %v654 = vmul.f32 %v652, 0.5
    %v655 = vadd.f32 %v654, 0.5
    %v656 = vmul.f32 %v651, %v574
    %v657 = vrot.slane %v644, 4
    %v659 = vmul.f32 %v646, %v657
    %v660 = vadd.f32 %v656, %v659
    %v661 = vtanh.pop %v660
    %v662 = vmul.f32 %v655, %v661
    %s663 = scalar_lea.vmem [#allocation4], 16
    %v664 = vld [vmem:[%s663] sm:$0xff]
    %v665 = vpack.c.bf16 %v662, %v662
    %666 = vmatpush.bf16.msra.mxu0 %v458
    %667 = vmatpush.bf16.msra.mxu0 %v454
    %668 = vmatpush.bf16.msra.mxu0 %v450
    %669 = vmatpush.bf16.msra.mxu0 %v446
    %670 = vmatpush.bf16.msra.mxu0 %v442
    %671 = vmatpush.bf16.msra.mxu0 %v438
    %672 = vmatpush.bf16.msra.mxu0 %v434
    %673 = vmatpush.bf16.msra.mxu0 %v430
    %674 = vmatmul.bf16.gmra.mxu0 %v665
    %v675 = vpop.f32.mrf.mxu0
    %v676 = vadd.f32 0.0, %v675
    %v677 = vpop.f32.mrf.mxu0
    %678 = vdwg.mxu0
    %679 = vmatpush.bf16.msra.mxu0 %v459
    %680 = vmatpush.bf16.msra.mxu0 %v455
    %681 = vmatpush.bf16.msra.mxu0 %v451
    %682 = vmatpush.bf16.msra.mxu0 %v447
    %683 = vmatpush.bf16.msra.mxu0 %v443
    %684 = vmatpush.bf16.msra.mxu0 %v439
    %685 = vmatpush.bf16.msra.mxu0 %v435
    %686 = vmatpush.bf16.msra.mxu0 %v431
    %687 = vmatmul.bf16.gmra.mxu0 %v665
    %v688 = vpop.f32.mrf.mxu0
    %v689 = vadd.f32 0.0, %v688
    %v690 = vpop.f32.mrf.mxu0
    %691 = vdwg.mxu0
    %692 = vmatpush.bf16.msra.mxu0 %v460
    %693 = vmatpush.bf16.msra.mxu0 %v456
    %694 = vmatpush.bf16.msra.mxu0 %v452
    %695 = vmatpush.bf16.msra.mxu0 %v448
    %696 = vmatpush.bf16.msra.mxu0 %v444
    %697 = vmatpush.bf16.msra.mxu0 %v440
    %698 = vmatpush.bf16.msra.mxu0 %v436
    %699 = vmatpush.bf16.msra.mxu0 %v432
    %700 = vmatmul.bf16.gmra.mxu0 %v665
    %v701 = vpop.f32.mrf.mxu0
    %v702 = vadd.f32 0.0, %v701
    %v703 = vpop.f32.mrf.mxu0
    %704 = vdwg.mxu0
    %705 = vmatpush.bf16.msra.mxu0 %v461
    %706 = vmatpush.bf16.msra.mxu0 %v457
    %707 = vmatpush.bf16.msra.mxu0 %v453
    %708 = vmatpush.bf16.msra.mxu0 %v449
    %709 = vmatpush.bf16.msra.mxu0 %v445
    %710 = vmatpush.bf16.msra.mxu0 %v441
    %711 = vmatpush.bf16.msra.mxu0 %v437
    %712 = vmatpush.bf16.msra.mxu0 %v433
    %713 = vmatmul.bf16.gmra.mxu0 %v665
    %v714 = vpop.f32.mrf.mxu0
    %v715 = vadd.f32 0.0, %v714
    %v716 = vpop.f32.mrf.mxu0
    %717 = vdwg.mxu0
    %v722 = vrot.slane %v689, 6
    %v723 = vrot.slane %v702, 4
    %v724 = vrot.slane %v715, 2
    %v725 = vsel %vm246, %v676, %v722
    %v726 = vsel %vm248, %v723, %v724
    %v727 = vsel %vm250, %v725, %v726
    %v729 = vadd.f32 %v664, %v727
    %v730 = vtanh.pop %v729
    %v731 = vmul.f32 %v730, 0.5
    %v732 = vadd.f32 %v731, 0.5
    %v734 = vrot.slane %v730, 2
    %v736 = vmul.f32 %v734, 0.5
    %v737 = vadd.f32 %v736, 0.5
    %v738 = vrot.slane %v730, 6
    %v740 = vmul.f32 %v738, 0.5
    %v741 = vadd.f32 %v740, 0.5
    %v742 = vmul.f32 %v737, %v660
    %v743 = vrot.slane %v730, 4
    %v745 = vmul.f32 %v732, %v743
    %v746 = vadd.f32 %v742, %v745
    %v747 = vtanh.pop %v746
    %v748 = vmul.f32 %v741, %v747
    %s749 = scalar_lea.vmem [#allocation4], 24
    %v750 = vld [vmem:[%s749] sm:$0xff]
    %v751 = vpack.c.bf16 %v748, %v748
    %752 = vmatpush.bf16.msra.mxu0 %v458
    %753 = vmatpush.bf16.msra.mxu0 %v454
    %754 = vmatpush.bf16.msra.mxu0 %v450
    %755 = vmatpush.bf16.msra.mxu0 %v446
    %756 = vmatpush.bf16.msra.mxu0 %v442
    %757 = vmatpush.bf16.msra.mxu0 %v438
    %758 = vmatpush.bf16.msra.mxu0 %v434
    %759 = vmatpush.bf16.msra.mxu0 %v430
    %760 = vmatmul.bf16.gmra.mxu0 %v751
    %v761 = vpop.f32.mrf.mxu0
    %v762 = vadd.f32 0.0, %v761
    %v763 = vpop.f32.mrf.mxu0
    %764 = vdwg.mxu0
    %765 = vmatpush.bf16.msra.mxu0 %v459
    %766 = vmatpush.bf16.msra.mxu0 %v455
    %767 = vmatpush.bf16.msra.mxu0 %v451
    %768 = vmatpush.bf16.msra.mxu0 %v447
    %769 = vmatpush.bf16.msra.mxu0 %v443
    %770 = vmatpush.bf16.msra.mxu0 %v439
    %771 = vmatpush.bf16.msra.mxu0 %v435
    %772 = vmatpush.bf16.msra.mxu0 %v431
    %773 = vmatmul.bf16.gmra.mxu0 %v751
    %v774 = vpop.f32.mrf.mxu0
    %v775 = vadd.f32 0.0, %v774
    %v776 = vpop.f32.mrf.mxu0
    %777 = vdwg.mxu0
    %778 = vmatpush.bf16.msra.mxu0 %v460
    %779 = vmatpush.bf16.msra.mxu0 %v456
    %780 = vmatpush.bf16.msra.mxu0 %v452
    %781 = vmatpush.bf16.msra.mxu0 %v448
    %782 = vmatpush.bf16.msra.mxu0 %v444
    %783 = vmatpush.bf16.msra.mxu0 %v440
    %784 = vmatpush.bf16.msra.mxu0 %v436
    %785 = vmatpush.bf16.msra.mxu0 %v432
    %786 = vmatmul.bf16.gmra.mxu0 %v751
    %v787 = vpop.f32.mrf.mxu0
    %v788 = vadd.f32 0.0, %v787
    %v789 = vpop.f32.mrf.mxu0
    %790 = vdwg.mxu0
    %791 = vmatpush.bf16.msra.mxu0 %v461
    %792 = vmatpush.bf16.msra.mxu0 %v457
    %793 = vmatpush.bf16.msra.mxu0 %v453
    %794 = vmatpush.bf16.msra.mxu0 %v449
    %795 = vmatpush.bf16.msra.mxu0 %v445
    %796 = vmatpush.bf16.msra.mxu0 %v441
    %797 = vmatpush.bf16.msra.mxu0 %v437
    %798 = vmatpush.bf16.msra.mxu0 %v433
    %799 = vmatmul.bf16.gmra.mxu0 %v751
    %v800 = vpop.f32.mrf.mxu0
    %v801 = vadd.f32 0.0, %v800
    %v802 = vpop.f32.mrf.mxu0
    %803 = vdwg.mxu0
    %v808 = vrot.slane %v775, 6
    %v809 = vrot.slane %v788, 4
    %v810 = vrot.slane %v801, 2
    %v811 = vsel %vm246, %v762, %v808
    %v812 = vsel %vm248, %v809, %v810
    %v813 = vsel %vm250, %v811, %v812
    %v815 = vadd.f32 %v750, %v813
    %v816 = vtanh.pop %v815
    %v817 = vmul.f32 %v816, 0.5
    %v818 = vadd.f32 %v817, 0.5
    %v820 = vrot.slane %v816, 2
    %v822 = vmul.f32 %v820, 0.5
    %v823 = vadd.f32 %v822, 0.5
    %v824 = vrot.slane %v816, 6
    %v826 = vmul.f32 %v824, 0.5
    %v827 = vadd.f32 %v826, 0.5
    %v828 = vmul.f32 %v823, %v746
    %v829 = vrot.slane %v816, 4
    %v831 = vmul.f32 %v818, %v829
    %v832 = vadd.f32 %v828, %v831
    %v833 = vtanh.pop %v832
    %v834 = vmul.f32 %v827, %v833
    %s835 = scalar_lea.vmem [#allocation4], 32
    %v836 = vld [vmem:[%s835] sm:$0xff]
    %v837 = vpack.c.bf16 %v834, %v834
    %838 = vmatpush.bf16.msra.mxu0 %v458
    %839 = vmatpush.bf16.msra.mxu0 %v454
    %840 = vmatpush.bf16.msra.mxu0 %v450
    %841 = vmatpush.bf16.msra.mxu0 %v446
    %842 = vmatpush.bf16.msra.mxu0 %v442
    %843 = vmatpush.bf16.msra.mxu0 %v438
    %844 = vmatpush.bf16.msra.mxu0 %v434
    %845 = vmatpush.bf16.msra.mxu0 %v430
    %846 = vmatmul.bf16.gmra.mxu0 %v837
    %v847 = vpop.f32.mrf.mxu0
    %v848 = vadd.f32 0.0, %v847
    %v849 = vpop.f32.mrf.mxu0
    %850 = vdwg.mxu0
    %851 = vmatpush.bf16.msra.mxu0 %v459
    %852 = vmatpush.bf16.msra.mxu0 %v455
    %853 = vmatpush.bf16.msra.mxu0 %v451
    %854 = vmatpush.bf16.msra.mxu0 %v447
    %855 = vmatpush.bf16.msra.mxu0 %v443
    %856 = vmatpush.bf16.msra.mxu0 %v439
    %857 = vmatpush.bf16.msra.mxu0 %v435
    %858 = vmatpush.bf16.msra.mxu0 %v431
    %859 = vmatmul.bf16.gmra.mxu0 %v837
    %v860 = vpop.f32.mrf.mxu0
    %v861 = vadd.f32 0.0, %v860
    %v862 = vpop.f32.mrf.mxu0
    %863 = vdwg.mxu0
    %864 = vmatpush.bf16.msra.mxu0 %v460
    %865 = vmatpush.bf16.msra.mxu0 %v456
    %866 = vmatpush.bf16.msra.mxu0 %v452
    %867 = vmatpush.bf16.msra.mxu0 %v448
    %868 = vmatpush.bf16.msra.mxu0 %v444
    %869 = vmatpush.bf16.msra.mxu0 %v440
    %870 = vmatpush.bf16.msra.mxu0 %v436
    %871 = vmatpush.bf16.msra.mxu0 %v432
    %872 = vmatmul.bf16.gmra.mxu0 %v837
    %v873 = vpop.f32.mrf.mxu0
    %v874 = vadd.f32 0.0, %v873
    %v875 = vpop.f32.mrf.mxu0
    %876 = vdwg.mxu0
    %877 = vmatpush.bf16.msra.mxu0 %v461
    %878 = vmatpush.bf16.msra.mxu0 %v457
    %879 = vmatpush.bf16.msra.mxu0 %v453
    %880 = vmatpush.bf16.msra.mxu0 %v449
    %881 = vmatpush.bf16.msra.mxu0 %v445
    %882 = vmatpush.bf16.msra.mxu0 %v441
    %883 = vmatpush.bf16.msra.mxu0 %v437
    %884 = vmatpush.bf16.msra.mxu0 %v433
    %885 = vmatmul.bf16.gmra.mxu0 %v837
    %v886 = vpop.f32.mrf.mxu0
    %v887 = vadd.f32 0.0, %v886
    %v888 = vpop.f32.mrf.mxu0
    %889 = vdwg.mxu0
    %v894 = vrot.slane %v861, 6
    %v895 = vrot.slane %v874, 4
    %v896 = vrot.slane %v887, 2
    %v897 = vsel %vm246, %v848, %v894
    %v898 = vsel %vm248, %v895, %v896
    %v899 = vsel %vm250, %v897, %v898
    %v901 = vadd.f32 %v836, %v899
    %v902 = vtanh.pop %v901
    %v903 = vmul.f32 %v902, 0.5
    %v904 = vadd.f32 %v903, 0.5
    %v906 = vrot.slane %v902, 2
    %v908 = vmul.f32 %v906, 0.5
    %v909 = vadd.f32 %v908, 0.5
    %v910 = vrot.slane %v902, 6
    %v912 = vmul.f32 %v910, 0.5
    %v913 = vadd.f32 %v912, 0.5
    %v914 = vmul.f32 %v909, %v832
    %v915 = vrot.slane %v902, 4
    %v917 = vmul.f32 %v904, %v915
    %v918 = vadd.f32 %v914, %v917
    %v919 = vtanh.pop %v918
    %v920 = vmul.f32 %v913, %v919
    %s921 = scalar_lea.vmem [#allocation4], 40
    %v922 = vld [vmem:[%s921] sm:$0xff]
    %v923 = vpack.c.bf16 %v920, %v920
    %924 = vmatpush.bf16.msra.mxu0 %v458
    %925 = vmatpush.bf16.msra.mxu0 %v454
    %926 = vmatpush.bf16.msra.mxu0 %v450
    %927 = vmatpush.bf16.msra.mxu0 %v446
    %928 = vmatpush.bf16.msra.mxu0 %v442
    %929 = vmatpush.bf16.msra.mxu0 %v438
    %930 = vmatpush.bf16.msra.mxu0 %v434
    %931 = vmatpush.bf16.msra.mxu0 %v430
    %932 = vmatmul.bf16.gmra.mxu0 %v923
    %v933 = vpop.f32.mrf.mxu0
    %v934 = vadd.f32 0.0, %v933
    %v935 = vpop.f32.mrf.mxu0
    %936 = vdwg.mxu0
    %937 = vmatpush.bf16.msra.mxu0 %v459
    %938 = vmatpush.bf16.msra.mxu0 %v455
    %939 = vmatpush.bf16.msra.mxu0 %v451
    %940 = vmatpush.bf16.msra.mxu0 %v447
    %941 = vmatpush.bf16.msra.mxu0 %v443
    %942 = vmatpush.bf16.msra.mxu0 %v439
    %943 = vmatpush.bf16.msra.mxu0 %v435
    %944 = vmatpush.bf16.msra.mxu0 %v431
    %945 = vmatmul.bf16.gmra.mxu0 %v923
    %v946 = vpop.f32.mrf.mxu0
    %v947 = vadd.f32 0.0, %v946
    %v948 = vpop.f32.mrf.mxu0
    %949 = vdwg.mxu0
    %950 = vmatpush.bf16.msra.mxu0 %v460
    %951 = vmatpush.bf16.msra.mxu0 %v456
    %952 = vmatpush.bf16.msra.mxu0 %v452
    %953 = vmatpush.bf16.msra.mxu0 %v448
    %954 = vmatpush.bf16.msra.mxu0 %v444
    %955 = vmatpush.bf16.msra.mxu0 %v440
    %956 = vmatpush.bf16.msra.mxu0 %v436
    %957 = vmatpush.bf16.msra.mxu0 %v432
    %958 = vmatmul.bf16.gmra.mxu0 %v923
    %v959 = vpop.f32.mrf.mxu0
    %v960 = vadd.f32 0.0, %v959
    %v961 = vpop.f32.mrf.mxu0
    %962 = vdwg.mxu0
    %963 = vmatpush.bf16.msra.mxu0 %v461
    %964 = vmatpush.bf16.msra.mxu0 %v457
    %965 = vmatpush.bf16.msra.mxu0 %v453
    %966 = vmatpush.bf16.msra.mxu0 %v449
    %967 = vmatpush.bf16.msra.mxu0 %v445
    %968 = vmatpush.bf16.msra.mxu0 %v441
    %969 = vmatpush.bf16.msra.mxu0 %v437
    %970 = vmatpush.bf16.msra.mxu0 %v433
    %971 = vmatmul.bf16.gmra.mxu0 %v923
    %v972 = vpop.f32.mrf.mxu0
    %v973 = vadd.f32 0.0, %v972
    %v974 = vpop.f32.mrf.mxu0
    %975 = vdwg.mxu0
    %v980 = vrot.slane %v947, 6
    %v981 = vrot.slane %v960, 4
    %v982 = vrot.slane %v973, 2
    %v983 = vsel %vm246, %v934, %v980
    %v984 = vsel %vm248, %v981, %v982
    %v985 = vsel %vm250, %v983, %v984
    %v987 = vadd.f32 %v922, %v985
    %v988 = vtanh.pop %v987
    %v989 = vmul.f32 %v988, 0.5
    %v990 = vadd.f32 %v989, 0.5
    %v992 = vrot.slane %v988, 2
    %v994 = vmul.f32 %v992, 0.5
    %v995 = vadd.f32 %v994, 0.5
    %v996 = vrot.slane %v988, 6
    %v998 = vmul.f32 %v996, 0.5
    %v999 = vadd.f32 %v998, 0.5
    %v1000 = vmul.f32 %v995, %v918
    %v1001 = vrot.slane %v988, 4
    %v1003 = vmul.f32 %v990, %v1001
    %v1004 = vadd.f32 %v1000, %v1003
    %v1005 = vtanh.pop %v1004
    %v1006 = vmul.f32 %v999, %v1005
    %s1007 = scalar_lea.vmem [#allocation4], 48
    %v1008 = vld [vmem:[%s1007] sm:$0xff]
    %v1009 = vpack.c.bf16 %v1006, %v1006
    %1010 = vmatpush.bf16.msra.mxu0 %v458
    %1011 = vmatpush.bf16.msra.mxu0 %v454
    %1012 = vmatpush.bf16.msra.mxu0 %v450
    %1013 = vmatpush.bf16.msra.mxu0 %v446
    %1014 = vmatpush.bf16.msra.mxu0 %v442
    %1015 = vmatpush.bf16.msra.mxu0 %v438
    %1016 = vmatpush.bf16.msra.mxu0 %v434
    %1017 = vmatpush.bf16.msra.mxu0 %v430
    %1018 = vmatmul.bf16.gmra.mxu0 %v1009
    %v1019 = vpop.f32.mrf.mxu0
    %v1020 = vadd.f32 0.0, %v1019
    %v1021 = vpop.f32.mrf.mxu0
    %1022 = vdwg.mxu0
    %1023 = vmatpush.bf16.msra.mxu0 %v459
    %1024 = vmatpush.bf16.msra.mxu0 %v455
    %1025 = vmatpush.bf16.msra.mxu0 %v451
    %1026 = vmatpush.bf16.msra.mxu0 %v447
    %1027 = vmatpush.bf16.msra.mxu0 %v443
    %1028 = vmatpush.bf16.msra.mxu0 %v439
    %1029 = vmatpush.bf16.msra.mxu0 %v435
    %1030 = vmatpush.bf16.msra.mxu0 %v431
    %1031 = vmatmul.bf16.gmra.mxu0 %v1009
    %v1032 = vpop.f32.mrf.mxu0
    %v1033 = vadd.f32 0.0, %v1032
    %v1034 = vpop.f32.mrf.mxu0
    %1035 = vdwg.mxu0
    %1036 = vmatpush.bf16.msra.mxu0 %v460
    %1037 = vmatpush.bf16.msra.mxu0 %v456
    %1038 = vmatpush.bf16.msra.mxu0 %v452
    %1039 = vmatpush.bf16.msra.mxu0 %v448
    %1040 = vmatpush.bf16.msra.mxu0 %v444
    %1041 = vmatpush.bf16.msra.mxu0 %v440
    %1042 = vmatpush.bf16.msra.mxu0 %v436
    %1043 = vmatpush.bf16.msra.mxu0 %v432
    %1044 = vmatmul.bf16.gmra.mxu0 %v1009
    %v1045 = vpop.f32.mrf.mxu0
    %v1046 = vadd.f32 0.0, %v1045
    %v1047 = vpop.f32.mrf.mxu0
    %1048 = vdwg.mxu0
    %1049 = vmatpush.bf16.msra.mxu0 %v461
    %1050 = vmatpush.bf16.msra.mxu0 %v457
    %1051 = vmatpush.bf16.msra.mxu0 %v453
    %1052 = vmatpush.bf16.msra.mxu0 %v449
    %1053 = vmatpush.bf16.msra.mxu0 %v445
    %1054 = vmatpush.bf16.msra.mxu0 %v441
    %1055 = vmatpush.bf16.msra.mxu0 %v437
    %1056 = vmatpush.bf16.msra.mxu0 %v433
    %1057 = vmatmul.bf16.gmra.mxu0 %v1009
    %v1058 = vpop.f32.mrf.mxu0
    %v1059 = vadd.f32 0.0, %v1058
    %v1060 = vpop.f32.mrf.mxu0
    %1061 = vdwg.mxu0
    %v1066 = vrot.slane %v1033, 6
    %v1067 = vrot.slane %v1046, 4
    %v1068 = vrot.slane %v1059, 2
    %v1069 = vsel %vm246, %v1020, %v1066
    %v1070 = vsel %vm248, %v1067, %v1068
    %v1071 = vsel %vm250, %v1069, %v1070
    %v1073 = vadd.f32 %v1008, %v1071
    %v1074 = vtanh.pop %v1073
    %v1075 = vmul.f32 %v1074, 0.5
    %v1076 = vadd.f32 %v1075, 0.5
    %v1078 = vrot.slane %v1074, 2
    %v1080 = vmul.f32 %v1078, 0.5
    %v1081 = vadd.f32 %v1080, 0.5
    %v1082 = vrot.slane %v1074, 6
    %v1084 = vmul.f32 %v1082, 0.5
    %v1085 = vadd.f32 %v1084, 0.5
    %v1086 = vmul.f32 %v1081, %v1004
    %v1087 = vrot.slane %v1074, 4
    %v1089 = vmul.f32 %v1076, %v1087
    %v1090 = vadd.f32 %v1086, %v1089
    %v1091 = vtanh.pop %v1090
    %v1092 = vmul.f32 %v1085, %v1091
    %s1093 = scalar_lea.vmem [#allocation4], 56
    %v1094 = vld [vmem:[%s1093] sm:$0xff]
    %v1095 = vpack.c.bf16 %v1092, %v1092
    %1096 = vmatpush.bf16.msra.mxu0 %v458
    %1097 = vmatpush.bf16.msra.mxu0 %v454
    %1098 = vmatpush.bf16.msra.mxu0 %v450
    %1099 = vmatpush.bf16.msra.mxu0 %v446
    %1100 = vmatpush.bf16.msra.mxu0 %v442
    %1101 = vmatpush.bf16.msra.mxu0 %v438
    %1102 = vmatpush.bf16.msra.mxu0 %v434
    %1103 = vmatpush.bf16.msra.mxu0 %v430
    %1104 = vmatmul.bf16.gmra.mxu0 %v1095
    %v1105 = vpop.f32.mrf.mxu0
    %v1106 = vadd.f32 0.0, %v1105
    %v1107 = vpop.f32.mrf.mxu0
    %1108 = vdwg.mxu0
    %1109 = vmatpush.bf16.msra.mxu0 %v459
    %1110 = vmatpush.bf16.msra.mxu0 %v455
    %1111 = vmatpush.bf16.msra.mxu0 %v451
    %1112 = vmatpush.bf16.msra.mxu0 %v447
    %1113 = vmatpush.bf16.msra.mxu0 %v443
    %1114 = vmatpush.bf16.msra.mxu0 %v439
    %1115 = vmatpush.bf16.msra.mxu0 %v435
    %1116 = vmatpush.bf16.msra.mxu0 %v431
    %1117 = vmatmul.bf16.gmra.mxu0 %v1095
    %v1118 = vpop.f32.mrf.mxu0
    %v1119 = vadd.f32 0.0, %v1118
    %v1120 = vpop.f32.mrf.mxu0
    %1121 = vdwg.mxu0
    %1122 = vmatpush.bf16.msra.mxu0 %v460
    %1123 = vmatpush.bf16.msra.mxu0 %v456
    %1124 = vmatpush.bf16.msra.mxu0 %v452
    %1125 = vmatpush.bf16.msra.mxu0 %v448
    %1126 = vmatpush.bf16.msra.mxu0 %v444
    %1127 = vmatpush.bf16.msra.mxu0 %v440
    %1128 = vmatpush.bf16.msra.mxu0 %v436
    %1129 = vmatpush.bf16.msra.mxu0 %v432
    %1130 = vmatmul.bf16.gmra.mxu0 %v1095
    %v1131 = vpop.f32.mrf.mxu0
    %v1132 = vadd.f32 0.0, %v1131
    %v1133 = vpop.f32.mrf.mxu0
    %1134 = vdwg.mxu0
    %1135 = vmatpush.bf16.msra.mxu0 %v461
    %1136 = vmatpush.bf16.msra.mxu0 %v457
    %1137 = vmatpush.bf16.msra.mxu0 %v453
    %1138 = vmatpush.bf16.msra.mxu0 %v449
    %1139 = vmatpush.bf16.msra.mxu0 %v445
    %1140 = vmatpush.bf16.msra.mxu0 %v441
    %1141 = vmatpush.bf16.msra.mxu0 %v437
    %1142 = vmatpush.bf16.msra.mxu0 %v433
    %1143 = vmatmul.bf16.gmra.mxu0 %v1095
    %v1144 = vpop.f32.mrf.mxu0
    %v1145 = vadd.f32 0.0, %v1144
    %v1146 = vpop.f32.mrf.mxu0
    %1147 = vdwg.mxu0
    %v1152 = vrot.slane %v1119, 6
    %v1153 = vrot.slane %v1132, 4
    %v1154 = vrot.slane %v1145, 2
    %v1155 = vsel %vm246, %v1106, %v1152
    %v1156 = vsel %vm248, %v1153, %v1154
    %v1157 = vsel %vm250, %v1155, %v1156
    %v1159 = vadd.f32 %v1094, %v1157
    %v1160 = vtanh.pop %v1159
    %v1161 = vmul.f32 %v1160, 0.5
    %v1162 = vadd.f32 %v1161, 0.5
    %v1164 = vrot.slane %v1160, 2
    %v1166 = vmul.f32 %v1164, 0.5
    %v1167 = vadd.f32 %v1166, 0.5
    %v1168 = vrot.slane %v1160, 6
    %v1170 = vmul.f32 %v1168, 0.5
    %v1171 = vadd.f32 %v1170, 0.5
    %v1172 = vmul.f32 %v1167, %v1090
    %v1173 = vrot.slane %v1160, 4
    %v1175 = vmul.f32 %v1162, %v1173
    %v1176 = vadd.f32 %v1172, %v1175
    %v1177 = vtanh.pop %v1176
    %v1178 = vmul.f32 %v1171, %v1177
    %1179 = vst [vmem:[#allocation2] sm:$0x3] %v1178
    %1180 = vst [vmem:[#allocation3] sm:$0x3] %v1176
    // Predicated region
    $region50: #{tpu_custom_call.1} parent=1 // pred_check
      %p1181 = pneg %p101
    $region51: #{tpu_custom_call.1} parent=1 // pred_check_branch
      %1183 = sbr.rel (%p1181) target = $region53
    $region52: #{tpu_custom_call.1} parent=1 // pred_region
      %v1184 = vpack.c.bf16 %v1178, %v1178
      %v1185 = vld [vmem:[#allocation13] sm:$0xf]
      %v1186 = vld [vmem:[#allocation13 + $0x4] sm:$0xf]
      %v1187 = vld [vmem:[#allocation13 + $0x8] sm:$0xf]
      %v1188 = vld [vmem:[#allocation13 + $0xc] sm:$0xf]
      %v1189 = vld [vmem:[#allocation13 + $0x10] sm:$0xf]
      %v1190 = vld [vmem:[#allocation13 + $0x14] sm:$0xf]
      %v1191 = vld [vmem:[#allocation13 + $0x18] sm:$0xf]
      %v1192 = vld [vmem:[#allocation13 + $0x1c] sm:$0xf]
      %v1193 = vld [vmem:[#allocation13 + $0x20] sm:$0xf]
      %v1194 = vld [vmem:[#allocation13 + $0x24] sm:$0xf]
      %v1195 = vld [vmem:[#allocation13 + $0x28] sm:$0xf]
      %v1196 = vld [vmem:[#allocation13 + $0x2c] sm:$0xf]
      %v1197 = vld [vmem:[#allocation13 + $0x30] sm:$0xf]
      %v1198 = vld [vmem:[#allocation13 + $0x34] sm:$0xf]
      %v1199 = vld [vmem:[#allocation13 + $0x38] sm:$0xf]
      %v1200 = vld [vmem:[#allocation13 + $0x3c] sm:$0xf]
      %v1201 = vld [vmem:[%s5] sm:$0x1]
      %v1203 = vperm.slane %v1201, 0
      %v1221 = vunpack.c.l.b16 %v1185
      %v1222 = vunpack.c.l.b16 %v1186
      %v1223 = vunpack.c.l.b16 %v1187
      %v1224 = vunpack.c.l.b16 %v1188
      %v1225 = vunpack.c.l.b16 %v1189
      %v1226 = vunpack.c.l.b16 %v1190
      %v1227 = vunpack.c.l.b16 %v1191
      %v1228 = vunpack.c.l.b16 %v1192
      %v1229 = vunpack.c.l.b16 %v1193
      %v1230 = vunpack.c.l.b16 %v1194
      %v1231 = vunpack.c.l.b16 %v1195
      %v1232 = vunpack.c.l.b16 %v1196
      %v1233 = vunpack.c.l.b16 %v1197
      %v1234 = vunpack.c.l.b16 %v1198
      %v1235 = vunpack.c.l.b16 %v1199
      %v1236 = vunpack.c.l.b16 %v1200
      %v1237 = vpack.c.b16 %v1222, %v1221
      %v1238 = vpack.c.b16 %v1224, %v1223
      %v1239 = vpack.c.b16 %v1226, %v1225
      %v1240 = vpack.c.b16 %v1228, %v1227
      %v1241 = vpack.c.b16 %v1230, %v1229
      %v1242 = vpack.c.b16 %v1232, %v1231
      %v1243 = vpack.c.b16 %v1234, %v1233
      %v1244 = vpack.c.b16 %v1236, %v1235
      %1253 = vmatpush.bf16.msra.mxu0 %v1244
      %1254 = vmatpush.bf16.msra.mxu0 %v1243
      %1255 = vmatpush.bf16.msra.mxu0 %v1242
      %1256 = vmatpush.bf16.msra.mxu0 %v1241
      %1257 = vmatpush.bf16.msra.mxu0 %v1240
      %1258 = vmatpush.bf16.msra.mxu0 %v1239
      %1259 = vmatpush.bf16.msra.mxu0 %v1238
      %1260 = vmatpush.bf16.msra.mxu0 %v1237
      %1261 = vmatmul.bf16.gmra.mxu0 %v1184
      %v1262 = vpop.f32.mrf.mxu0
      %v1263 = vadd.f32 %v1203, %v1262
      %v1264 = vpop.f32.mrf.mxu0
      %1265 = vdwg.mxu0
      %v1266 = vsel %vm246, %v1263, -inf
      %1267 = vmax.xlane.f32.xlu0 %v1266
      %v1268 = vpop.xlane.xlu0 %1267
      %v1269 = vsub.f32 %v1263, %v1268
      %v1270 = vmul.f32 %v1269, 1.442695
      %v1271 = vpow.pop %v1270
      %v1272 = vsel %vm246, %v1271, 0.0
      %1273 = vadd.xlane.f32.xlu0 %v1272
      %v1274 = vpop.xlane.xlu0 %1273
      %v1275 = vlog2.pop %v1274
      %v1276 = vmul.f32 %v1275, 0.6931472
      %v1277 = vsub.f32 %v1269, %v1276
      %1278 = vst [vmem:[#allocation14] sm:$0x3] %v1277
    $region53: #{tpu_custom_call.1} parent=1 // pred_fallthru
      _
    // Predicated region
    $region54: #{tpu_custom_call.1} parent=1 // pred_check
      _
    $region55: #{tpu_custom_call.1} parent=1 // pred_check_branch
      %1280 = sbr.rel (0) target = $region57
    $region56: #{tpu_custom_call.1} parent=1 // pred_region
      %1282 = vsyncadd [#allocation7], 0
      %s1284 = sshll.u32 [#allocation14], 4
      %s1285 = int_to_ptr.vmem [resolvable:$true] %s1284
      %s1286 = sshll.u32 %s6, 4
      %s1287 = int_to_ptr.hbm [resolvable:$true] %s1286
      %1289 = dma.vmem_to_hbm [thread:$0]  %s1285, 32, %s1287, [#allocation7]
    $region57: #{tpu_custom_call.1} parent=1 // pred_fallthru
      _
    // Predicated region
    $region58: #{tpu_custom_call.1} parent=1 // pred_check
      _
    $region59: #{tpu_custom_call.1} parent=1 // pred_check_branch
      %1291 = sbr.rel (0) target = $region61
    $region60: #{tpu_custom_call.1} parent=1 // pred_region
      %1293 = dma.done [#allocation7], 32
    $region61: #{tpu_custom_call.1} parent=1 // pred_fallthru
      _
    %1294 = vsyncpa [#allocation6], 1
    %1295 = vsyncpa [#allocation9], 1
    %1296 = vsyncpa [#allocation12], 1
    %1297 = vsyncpa [#allocation7], 1

</llo_original>
